<compile_context>
chip_gen: v5e
topology: v5e:2x2
jax: 0.10.0
libtpu: 0.0.40
codegen_flags: <defaults>
</compile_context>

<pallas_src>
import functools

import jax
import jax.numpy as jnp
from jax.experimental import pallas as pl
from jax.experimental.pallas import tpu as pltpu


def _rhn_recurrence_kernel(L, H, TT, xp_ref, rf_ref, brf_ref, out_ref, h_scratch):
    """One grid step = TT timesteps of the full L-tick highway recurrence."""
    # init_state(): zero hidden state at the very first timestep.
    @pl.when(pl.program_id(0) == 0)
    def _():
        h_scratch[...] = jnp.zeros_like(h_scratch)

    h = h_scratch[...]                                   # (B, H) f32 carry

    for tt in range(TT):                                 # static, fully unrolled
        xg = xp_ref[tt]                                  # (B, 3H) f32 = W_*x + bW_*
        for tick in range(L):
            # Fused gate matmul: one (B,H)x(H,3H) MXU op per tick, f32 acc.
            g = (jnp.dot(h.astype(rf_ref.dtype), rf_ref[tick],
                         preferred_element_type=jnp.float32)
                 + brf_ref[tick])                        # (B, 3H) f32
            if tick == 0:
                g = g + xg                               # first HighwayBlock adds W_* x
            hl = g[:, 0 * H:1 * H]
            tl = g[:, 1 * H:2 * H]
            cl = g[:, 2 * H:3 * H]
            h = hl * tl + h * cl                         # f32 elementwise gate math
            out_ref[tt, tick] = h.astype(out_ref.dtype)  # raw hidden state out

    h_scratch[...] = h                                   # carry to next grid step


def _pick_time_chunk(T, max_chunk=32):
    """Largest divisor of T that is <= max_chunk (timesteps per grid step)."""
    for tt in range(min(T, max_chunk), 0, -1):
        if T % tt == 0:
            return tt
    return 1


def fuse_params(params, weight_dtype):
    """Host-side fusion.  Gate order [hl, tl, cl] = [(W_H,R_H), (W_C,R_C), (W_T,R_T)]
    (matches the PyTorch forward: hl=W_H+R_H, tl=W_C+R_C, cl=W_T+R_T)."""
    win = jnp.concatenate([params["wH"], params["wC"], params["wT"]], axis=1)         # (D, 3H)
    bwin = jnp.concatenate([params["bWH"], params["bWC"], params["bWT"]], axis=1)      # (1, 3H)
    rfused = jnp.concatenate([params["rH"], params["rC"], params["rT"]], axis=2)       # (L, H, 3H)
    brfused = jnp.concatenate([params["bRH"], params["bRC"], params["bRT"]], axis=2)   # (L, 1, 3H)
    return {
        "win": win.astype(weight_dtype),
        "bwin": bwin.astype(jnp.float32),
        "rfused": rfused.astype(weight_dtype),
        "brfused": brfused.astype(jnp.float32),
        "wout": params["wout"].astype(weight_dtype),
        "bout": params["bout"].astype(jnp.float32),
    }


def recurrent_highway(x, fused, L):
    """x: (B, T, D) f32.  Returns ((T*L*B), V) f32, matching torch.cat(layer_outputs, dim=0)."""
    B, T, D = x.shape
    H = fused["rfused"].shape[1]
    V = fused["wout"].shape[-1]
    w_itemsize = jnp.dtype(fused["rfused"].dtype).itemsize

    # ---- Stage 1 (hoisted, parallel): x projection for ALL timesteps, time-major output.
    xproj = (jnp.einsum("btd,dg->tbg",
                        x.astype(fused["win"].dtype), fused["win"],
                        preferred_element_type=jnp.float32)
             + fused["bwin"])                                        # (T, B, 3H) f32

    # ---- Stage 2 (serial): the recurrence itself, TT timesteps per grid step.
    TT = _pick_time_chunk(T)
    grid = (T // TT,)
    kernel = functools.partial(_rhn_recurrence_kernel, L, H, TT)

    cost = pl.CostEstimate(
        flops=2 * T * L * B * H * 3 * H + 4 * T * L * B * H,
        transcendentals=0,
        bytes_accessed=(T * B * 3 * H * 4                 # x projection in (f32)
                        + T * L * B * H * 4               # hidden states out (f32)
                        + L * H * 3 * H * w_itemsize      # resident R weights
                        + L * 3 * H * 4),                 # resident f32 R biases
    )

    h_all = pl.pallas_call(
        kernel,
        out_shape=jax.ShapeDtypeStruct((T, L, B, H), jnp.float32),
        grid_spec=pltpu.PrefetchScalarGridSpec(
            num_scalar_prefetch=0,
            grid=grid,
            in_specs=[
                # time-chunked x projection (only per-step DMA'd operand)
                pl.BlockSpec((TT, B, 3 * H), lambda t: (t, 0, 0)),
                # whole-array VMEM residents: single copy, no double buffering
                pl.BlockSpec(memory_space=pltpu.MemorySpace.VMEM),   # fused R weights (L,H,3H)
                pl.BlockSpec(memory_space=pltpu.MemorySpace.VMEM),   # fused R biases  (L,1,3H)
            ],
            out_specs=pl.BlockSpec((TT, L, B, H), lambda t: (t, 0, 0, 0)),
            scratch_shapes=[pltpu.VMEM((B, H), jnp.float32)],        # hidden-state carry
        ),
        compiler_params=pltpu.CompilerParams(
            dimension_semantics=("arbitrary",)),                     # time is a true recurrence
        cost_estimate=cost,
    )(xproj, fused["rfused"], fused["brfused"])

    # ---- Stage 3 (hoisted, parallel): deferred output projection, one big GEMM.
    h_flat = h_all.reshape(T * L * B, H)   # (t, tick, b) ordering == torch.cat order
    out = (jnp.dot(h_flat.astype(fused["wout"].dtype), fused["wout"],
                   preferred_element_type=jnp.float32)
           + fused["bout"])                                          # (T*L*B, V) f32
    return out


def reference(x, params, L):
    """Pure-JAX f32 replica of the PyTorch forward, for correctness checking."""
    B, T, D = x.shape
    H = params["rH"].shape[-1]
    h = jnp.zeros((B, H), jnp.float32)
    outs = []
    for step in range(T):
        xt = x[:, step, :]
        for tick in range(L):
            if tick == 0:
                hl = xt @ params["wH"] + params["bWH"] + h @ params["rH"][0] + params["bRH"][0]
                tl = xt @ params["wC"] + params["bWC"] + h @ params["rC"][0] + params["bRC"][0]
                cl = xt @ params["wT"] + params["bWT"] + h @ params["rT"][0] + params["bRT"][0]
            else:
                hl = h @ params["rH"][tick] + params["bRH"][tick]
                tl = h @ params["rC"][tick] + params["bRC"][tick]
                cl = h @ params["rT"][tick] + params["bRT"][tick]
            h = hl * tl + h * cl
            outs.append(h @ params["wout"] + params["bout"])
    return jnp.concatenate(outs, axis=0)


def make_params(key, D, H, L, V, scale=0.1):
    ks = jax.random.split(key, 15)
    return {
        "wH":  scale * jax.random.normal(ks[0], (D, H), jnp.float32),
        "wT":  scale * jax.random.normal(ks[1], (D, H), jnp.float32),
        "wC":  scale * jax.random.normal(ks[2], (D, H), jnp.float32),
        "bWH": scale * jax.random.normal(ks[3], (1, H), jnp.float32),
        "bWT": scale * jax.random.normal(ks[4], (1, H), jnp.float32),
        "bWC": scale * jax.random.normal(ks[5], (1, H), jnp.float32),
        "rH":  scale * jax.random.normal(ks[6], (L, H, H), jnp.float32),
        "rT":  scale * jax.random.normal(ks[7], (L, H, H), jnp.float32),
        "rC":  scale * jax.random.normal(ks[8], (L, H, H), jnp.float32),
        "bRH": scale * jax.random.normal(ks[9], (L, 1, H), jnp.float32),
        "bRT": scale * jax.random.normal(ks[10], (L, 1, H), jnp.float32),
        "bRC": scale * jax.random.normal(ks[11], (L, 1, H), jnp.float32),
        "wout":  scale * jax.random.normal(ks[12], (H, V), jnp.float32),
        "bout":  scale * jax.random.normal(ks[13], (1, V), jnp.float32),
    }


if __name__ == "__main__":
    B, T, D, H, L, V = 2, 8, 32, 32, 3, 16

    key = jax.random.PRNGKey(0)
    kx, kp = jax.random.split(key)
    x = jax.random.normal(kx, (B, T, D), jnp.float32)
    params = make_params(kp, D, H, L, V)

    # bf16 weights only where the MXU supports them natively; f32 elsewhere so the
    # hoisted XLA GEMMs never hit an unsupported bf16 dot on non-TPU backends.
    weight_dtype = jnp.bfloat16 if jax.default_backend() == "tpu" else jnp.float32
    fused = fuse_params(params, weight_dtype)   # host-side gate fusion + dtype cast

    out = recurrent_highway(x, fused, L)
    out = jax.block_until_ready(out)

    ref = reference(x, params, L)               # pure f32 reference
    assert out.shape == (T * L * B, V), out.shape
    if weight_dtype == jnp.bfloat16:
        rtol = atol = 5e-2                      # bf16 MXU inputs vs f32 reference
    else:
        rtol = atol = 1e-4
    max_err = float(jnp.max(jnp.abs(out - ref)))
    assert jnp.allclose(out, ref, rtol=rtol, atol=atol), max_err

    print("KERNEL_OK")
</pallas_src>

<mosaic_0001>
module attributes {stable_mosaic.version = 11 : i64} {
  func.func @_rhn_recurrence_kernel(%arg0: i32, %arg1: memref<8x2x96xf32, #tpu.memory_space<vmem>>, %arg2: memref<3x32x96xf32, #tpu.memory_space<vmem>>, %arg3: memref<3x1x96xf32, #tpu.memory_space<vmem>>, %arg4: memref<8x3x2x32xf32, #tpu.memory_space<vmem>>, %arg5: memref<2x32xf32, #tpu.memory_space<vmem>>) attributes {dimension_semantics = [#tpu.dimension_semantics<arbitrary>], iteration_bounds = array<i64: 1>, scalar_prefetch = 0 : i64, scratch_operands = 1 : i64, tpu.core_type = #tpu.core_type<tc>, window_params = [{transform_indices = @transform_0, window_bounds = array<i64: 8, 2, 96>}, {pipeline_mode = #tpu.pipeline_mode<synchronous>, transform_indices = @transform_1, window_bounds = array<i64: 3, 32, 96>}, {pipeline_mode = #tpu.pipeline_mode<synchronous>, transform_indices = @transform_2, window_bounds = array<i64: 3, 1, 96>}, {transform_indices = @transform_3, window_bounds = array<i64: 8, 3, 2, 32>}]} {
    %c0_i32 = arith.constant 0 : i32
    %0 = arith.cmpi eq, %arg0, %c0_i32 : i32
    %1 = arith.extui %0 : i1 to i32
    %c0_i32_0 = arith.constant 0 : i32
    %2 = arith.cmpi ne, %1, %c0_i32_0 : i32
    scf.if %2 {
      %cst_284 = arith.constant 0.000000e+00 : f32
      %413 = vector.broadcast %cst_284 : f32 to vector<2x32xf32>
      %c0_285 = arith.constant 0 : index
      %c0_286 = arith.constant 0 : index
      %414 = vector.load %arg5[%c0_285, %c0_286] : memref<2x32xf32, #tpu.memory_space<vmem>>, vector<2x32xf32>
      tpu.vector_store %arg5[%c0_285, %c0_286], %413 {strides = array<i32>} : memref<2x32xf32, #tpu.memory_space<vmem>>, vector<2x32xf32>,
    } else {
    }
    %c0 = arith.constant 0 : index
    %c0_1 = arith.constant 0 : index
    %3 = vector.load %arg5[%c0, %c0_1] : memref<2x32xf32, #tpu.memory_space<vmem>>, vector<2x32xf32>
    %c0_2 = arith.constant 0 : index
    %c0_3 = arith.constant 0 : index
    %c0_4 = arith.constant 0 : index
    %4 = vector.load %arg1[%c0_2, %c0_3, %c0_4] : memref<8x2x96xf32, #tpu.memory_space<vmem>>, vector<1x2x96xf32>
    %5 = vector.shape_cast %4 : vector<1x2x96xf32> to vector<2x96xf32>
    %c0_5 = arith.constant 0 : index
    %c0_6 = arith.constant 0 : index
    %c0_7 = arith.constant 0 : index
    %6 = vector.load %arg2[%c0_5, %c0_6, %c0_7] : memref<3x32x96xf32, #tpu.memory_space<vmem>>, vector<1x32x96xf32>
    %7 = vector.shape_cast %6 : vector<1x32x96xf32> to vector<32x96xf32>
    %cst = arith.constant dense<0.000000e+00> : vector<2x96xf32>
    %8 = tpu.matmul %3, %7, %cst {dimension_numbers = #tpu.dot_dimension_numbers<[1], [0], [0], [1], [0, 0, 1, 1], [], []>} : vector<2x32xf32>, vector<32x96xf32>, vector<2x96xf32> -> vector<2x96xf32>
    %c0_8 = arith.constant 0 : index
    %c0_9 = arith.constant 0 : index
    %c0_10 = arith.constant 0 : index
    %9 = vector.load %arg3[%c0_8, %c0_9, %c0_10] : memref<3x1x96xf32, #tpu.memory_space<vmem>>, vector<1x1x96xf32>
    %10 = vector.shape_cast %9 : vector<1x1x96xf32> to vector<1x96xf32>
    %11 = vector.broadcast %10 : vector<1x96xf32> to vector<2x96xf32>
    %12 = arith.addf %8, %11 : vector<2x96xf32>
    %13 = arith.addf %12, %5 : vector<2x96xf32>
    %14 = vector.extract_strided_slice %13 {offsets = [0, 0], sizes = [2, 32], strides = [1, 1]} : vector<2x96xf32> to vector<2x32xf32>
    %15 = vector.extract_strided_slice %13 {offsets = [0, 32], sizes = [2, 32], strides = [1, 1]} : vector<2x96xf32> to vector<2x32xf32>
    %16 = vector.extract_strided_slice %13 {offsets = [0, 64], sizes = [2, 32], strides = [1, 1]} : vector<2x96xf32> to vector<2x32xf32>
    %17 = arith.mulf %14, %15 : vector<2x32xf32>
    %18 = arith.mulf %3, %16 : vector<2x32xf32>
    %19 = arith.addf %17, %18 : vector<2x32xf32>
    %c0_11 = arith.constant 0 : index
    %c0_12 = arith.constant 0 : index
    %c0_13 = arith.constant 0 : index
    %c0_14 = arith.constant 0 : index
    %20 = vector.load %arg4[%c0_11, %c0_12, %c0_13, %c0_14] : memref<8x3x2x32xf32, #tpu.memory_space<vmem>>, vector<1x1x2x32xf32>
    %21 = vector.shape_cast %20 : vector<1x1x2x32xf32> to vector<2x32xf32>
    %22 = vector.shape_cast %19 : vector<2x32xf32> to vector<1x1x2x32xf32>
    tpu.vector_store %arg4[%c0_11, %c0_12, %c0_13, %c0_14], %22 {strides = array<i32>} : memref<8x3x2x32xf32, #tpu.memory_space<vmem>>, vector<1x1x2x32xf32>,
    %c1 = arith.constant 1 : index
    %c0_15 = arith.constant 0 : index
    %c0_16 = arith.constant 0 : index
    %23 = vector.load %arg2[%c1, %c0_15, %c0_16] : memref<3x32x96xf32, #tpu.memory_space<vmem>>, vector<1x32x96xf32>
    %24 = vector.shape_cast %23 : vector<1x32x96xf32> to vector<32x96xf32>
    %cst_17 = arith.constant dense<0.000000e+00> : vector<2x96xf32>
    %25 = tpu.matmul %19, %24, %cst_17 {dimension_numbers = #tpu.dot_dimension_numbers<[1], [0], [0], [1], [0, 0, 1, 1], [], []>} : vector<2x32xf32>, vector<32x96xf32>, vector<2x96xf32> -> vector<2x96xf32>
    %c1_18 = arith.constant 1 : index
    %c0_19 = arith.constant 0 : index
    %c0_20 = arith.constant 0 : index
    %26 = vector.load %arg3[%c1_18, %c0_19, %c0_20] : memref<3x1x96xf32, #tpu.memory_space<vmem>>, vector<1x1x96xf32>
    %27 = vector.shape_cast %26 : vector<1x1x96xf32> to vector<1x96xf32>
    %28 = vector.broadcast %27 : vector<1x96xf32> to vector<2x96xf32>
    %29 = arith.addf %25, %28 : vector<2x96xf32>
    %30 = vector.extract_strided_slice %29 {offsets = [0, 0], sizes = [2, 32], strides = [1, 1]} : vector<2x96xf32> to vector<2x32xf32>
    %31 = vector.extract_strided_slice %29 {offsets = [0, 32], sizes = [2, 32], strides = [1, 1]} : vector<2x96xf32> to vector<2x32xf32>
    %32 = vector.extract_strided_slice %29 {offsets = [0, 64], sizes = [2, 32], strides = [1, 1]} : vector<2x96xf32> to vector<2x32xf32>
    %33 = arith.mulf %30, %31 : vector<2x32xf32>
    %34 = arith.mulf %19, %32 : vector<2x32xf32>
    %35 = arith.addf %33, %34 : vector<2x32xf32>
    %c0_21 = arith.constant 0 : index
    %c1_22 = arith.constant 1 : index
    %c0_23 = arith.constant 0 : index
    %c0_24 = arith.constant 0 : index
    %36 = vector.load %arg4[%c0_21, %c1_22, %c0_23, %c0_24] : memref<8x3x2x32xf32, #tpu.memory_space<vmem>>, vector<1x1x2x32xf32>
    %37 = vector.shape_cast %36 : vector<1x1x2x32xf32> to vector<2x32xf32>
    %38 = vector.shape_cast %35 : vector<2x32xf32> to vector<1x1x2x32xf32>
    tpu.vector_store %arg4[%c0_21, %c1_22, %c0_23, %c0_24], %38 {strides = array<i32>} : memref<8x3x2x32xf32, #tpu.memory_space<vmem>>, vector<1x1x2x32xf32>,
    %c2 = arith.constant 2 : index
    %c0_25 = arith.constant 0 : index
    %c0_26 = arith.constant 0 : index
    %39 = vector.load %arg2[%c2, %c0_25, %c0_26] : memref<3x32x96xf32, #tpu.memory_space<vmem>>, vector<1x32x96xf32>
    %40 = vector.shape_cast %39 : vector<1x32x96xf32> to vector<32x96xf32>
    %cst_27 = arith.constant dense<0.000000e+00> : vector<2x96xf32>
    %41 = tpu.matmul %35, %40, %cst_27 {dimension_numbers = #tpu.dot_dimension_numbers<[1], [0], [0], [1], [0, 0, 1, 1], [], []>} : vector<2x32xf32>, vector<32x96xf32>, vector<2x96xf32> -> vector<2x96xf32>
    %c2_28 = arith.constant 2 : index
    %c0_29 = arith.constant 0 : index
    %c0_30 = arith.constant 0 : index
    %42 = vector.load %arg3[%c2_28, %c0_29, %c0_30] : memref<3x1x96xf32, #tpu.memory_space<vmem>>, vector<1x1x96xf32>
    %43 = vector.shape_cast %42 : vector<1x1x96xf32> to vector<1x96xf32>
    %44 = vector.broadcast %43 : vector<1x96xf32> to vector<2x96xf32>
    %45 = arith.addf %41, %44 : vector<2x96xf32>
    %46 = vector.extract_strided_slice %45 {offsets = [0, 0], sizes = [2, 32], strides = [1, 1]} : vector<2x96xf32> to vector<2x32xf32>
    %47 = vector.extract_strided_slice %45 {offsets = [0, 32], sizes = [2, 32], strides = [1, 1]} : vector<2x96xf32> to vector<2x32xf32>
    %48 = vector.extract_strided_slice %45 {offsets = [0, 64], sizes = [2, 32], strides = [1, 1]} : vector<2x96xf32> to vector<2x32xf32>
    %49 = arith.mulf %46, %47 : vector<2x32xf32>
    %50 = arith.mulf %35, %48 : vector<2x32xf32>
    %51 = arith.addf %49, %50 : vector<2x32xf32>
    %c0_31 = arith.constant 0 : index
    %c2_32 = arith.constant 2 : index
    %c0_33 = arith.constant 0 : index
    %c0_34 = arith.constant 0 : index
    %52 = vector.load %arg4[%c0_31, %c2_32, %c0_33, %c0_34] : memref<8x3x2x32xf32, #tpu.memory_space<vmem>>, vector<1x1x2x32xf32>
    %53 = vector.shape_cast %52 : vector<1x1x2x32xf32> to vector<2x32xf32>
    %54 = vector.shape_cast %51 : vector<2x32xf32> to vector<1x1x2x32xf32>
    tpu.vector_store %arg4[%c0_31, %c2_32, %c0_33, %c0_34], %54 {strides = array<i32>} : memref<8x3x2x32xf32, #tpu.memory_space<vmem>>, vector<1x1x2x32xf32>,
    %c1_35 = arith.constant 1 : index
    %c0_36 = arith.constant 0 : index
    %c0_37 = arith.constant 0 : index
    %55 = vector.load %arg1[%c1_35, %c0_36, %c0_37] : memref<8x2x96xf32, #tpu.memory_space<vmem>>, vector<1x2x96xf32>
    %56 = vector.shape_cast %55 : vector<1x2x96xf32> to vector<2x96xf32>
    %c0_38 = arith.constant 0 : index
    %c0_39 = arith.constant 0 : index
    %c0_40 = arith.constant 0 : index
    %57 = vector.load %arg2[%c0_38, %c0_39, %c0_40] : memref<3x32x96xf32, #tpu.memory_space<vmem>>, vector<1x32x96xf32>
    %58 = vector.shape_cast %57 : vector<1x32x96xf32> to vector<32x96xf32>
    %cst_41 = arith.constant dense<0.000000e+00> : vector<2x96xf32>
    %59 = tpu.matmul %51, %58, %cst_41 {dimension_numbers = #tpu.dot_dimension_numbers<[1], [0], [0], [1], [0, 0, 1, 1], [], []>} : vector<2x32xf32>, vector<32x96xf32>, vector<2x96xf32> -> vector<2x96xf32>
    %c0_42 = arith.constant 0 : index
    %c0_43 = arith.constant 0 : index
    %c0_44 = arith.constant 0 : index
    %60 = vector.load %arg3[%c0_42, %c0_43, %c0_44] : memref<3x1x96xf32, #tpu.memory_space<vmem>>, vector<1x1x96xf32>
    %61 = vector.shape_cast %60 : vector<1x1x96xf32> to vector<1x96xf32>
    %62 = vector.broadcast %61 : vector<1x96xf32> to vector<2x96xf32>
    %63 = arith.addf %59, %62 : vector<2x96xf32>
    %64 = arith.addf %63, %56 : vector<2x96xf32>
    %65 = vector.extract_strided_slice %64 {offsets = [0, 0], sizes = [2, 32], strides = [1, 1]} : vector<2x96xf32> to vector<2x32xf32>
    %66 = vector.extract_strided_slice %64 {offsets = [0, 32], sizes = [2, 32], strides = [1, 1]} : vector<2x96xf32> to vector<2x32xf32>
    %67 = vector.extract_strided_slice %64 {offsets = [0, 64], sizes = [2, 32], strides = [1, 1]} : vector<2x96xf32> to vector<2x32xf32>
    %68 = arith.mulf %65, %66 : vector<2x32xf32>
    %69 = arith.mulf %51, %67 : vector<2x32xf32>
    %70 = arith.addf %68, %69 : vector<2x32xf32>
    %c1_45 = arith.constant 1 : index
    %c0_46 = arith.constant 0 : index
    %c0_47 = arith.constant 0 : index
    %c0_48 = arith.constant 0 : index
    %71 = vector.load %arg4[%c1_45, %c0_46, %c0_47, %c0_48] : memref<8x3x2x32xf32, #tpu.memory_space<vmem>>, vector<1x1x2x32xf32>
    %72 = vector.shape_cast %71 : vector<1x1x2x32xf32> to vector<2x32xf32>
    %73 = vector.shape_cast %70 : vector<2x32xf32> to vector<1x1x2x32xf32>
    tpu.vector_store %arg4[%c1_45, %c0_46, %c0_47, %c0_48], %73 {strides = array<i32>} : memref<8x3x2x32xf32, #tpu.memory_space<vmem>>, vector<1x1x2x32xf32>,
    %c1_49 = arith.constant 1 : index
    %c0_50 = arith.constant 0 : index
    %c0_51 = arith.constant 0 : index
    %74 = vector.load %arg2[%c1_49, %c0_50, %c0_51] : memref<3x32x96xf32, #tpu.memory_space<vmem>>, vector<1x32x96xf32>
    %75 = vector.shape_cast %74 : vector<1x32x96xf32> to vector<32x96xf32>
    %cst_52 = arith.constant dense<0.000000e+00> : vector<2x96xf32>
    %76 = tpu.matmul %70, %75, %cst_52 {dimension_numbers = #tpu.dot_dimension_numbers<[1], [0], [0], [1], [0, 0, 1, 1], [], []>} : vector<2x32xf32>, vector<32x96xf32>, vector<2x96xf32> -> vector<2x96xf32>
    %c1_53 = arith.constant 1 : index
    %c0_54 = arith.constant 0 : index
    %c0_55 = arith.constant 0 : index
    %77 = vector.load %arg3[%c1_53, %c0_54, %c0_55] : memref<3x1x96xf32, #tpu.memory_space<vmem>>, vector<1x1x96xf32>
    %78 = vector.shape_cast %77 : vector<1x1x96xf32> to vector<1x96xf32>
    %79 = vector.broadcast %78 : vector<1x96xf32> to vector<2x96xf32>
    %80 = arith.addf %76, %79 : vector<2x96xf32>
    %81 = vector.extract_strided_slice %80 {offsets = [0, 0], sizes = [2, 32], strides = [1, 1]} : vector<2x96xf32> to vector<2x32xf32>
    %82 = vector.extract_strided_slice %80 {offsets = [0, 32], sizes = [2, 32], strides = [1, 1]} : vector<2x96xf32> to vector<2x32xf32>
    %83 = vector.extract_strided_slice %80 {offsets = [0, 64], sizes = [2, 32], strides = [1, 1]} : vector<2x96xf32> to vector<2x32xf32>
    %84 = arith.mulf %81, %82 : vector<2x32xf32>
    %85 = arith.mulf %70, %83 : vector<2x32xf32>
    %86 = arith.addf %84, %85 : vector<2x32xf32>
    %c1_56 = arith.constant 1 : index
    %c1_57 = arith.constant 1 : index
    %c0_58 = arith.constant 0 : index
    %c0_59 = arith.constant 0 : index
    %87 = vector.load %arg4[%c1_56, %c1_57, %c0_58, %c0_59] : memref<8x3x2x32xf32, #tpu.memory_space<vmem>>, vector<1x1x2x32xf32>
    %88 = vector.shape_cast %87 : vector<1x1x2x32xf32> to vector<2x32xf32>
    %89 = vector.shape_cast %86 : vector<2x32xf32> to vector<1x1x2x32xf32>
    tpu.vector_store %arg4[%c1_56, %c1_57, %c0_58, %c0_59], %89 {strides = array<i32>} : memref<8x3x2x32xf32, #tpu.memory_space<vmem>>, vector<1x1x2x32xf32>,
    %c2_60 = arith.constant 2 : index
    %c0_61 = arith.constant 0 : index
    %c0_62 = arith.constant 0 : index
    %90 = vector.load %arg2[%c2_60, %c0_61, %c0_62] : memref<3x32x96xf32, #tpu.memory_space<vmem>>, vector<1x32x96xf32>
    %91 = vector.shape_cast %90 : vector<1x32x96xf32> to vector<32x96xf32>
    %cst_63 = arith.constant dense<0.000000e+00> : vector<2x96xf32>
    %92 = tpu.matmul %86, %91, %cst_63 {dimension_numbers = #tpu.dot_dimension_numbers<[1], [0], [0], [1], [0, 0, 1, 1], [], []>} : vector<2x32xf32>, vector<32x96xf32>, vector<2x96xf32> -> vector<2x96xf32>
    %c2_64 = arith.constant 2 : index
    %c0_65 = arith.constant 0 : index
    %c0_66 = arith.constant 0 : index
    %93 = vector.load %arg3[%c2_64, %c0_65, %c0_66] : memref<3x1x96xf32, #tpu.memory_space<vmem>>, vector<1x1x96xf32>
    %94 = vector.shape_cast %93 : vector<1x1x96xf32> to vector<1x96xf32>
    %95 = vector.broadcast %94 : vector<1x96xf32> to vector<2x96xf32>
    %96 = arith.addf %92, %95 : vector<2x96xf32>
    %97 = vector.extract_strided_slice %96 {offsets = [0, 0], sizes = [2, 32], strides = [1, 1]} : vector<2x96xf32> to vector<2x32xf32>
    %98 = vector.extract_strided_slice %96 {offsets = [0, 32], sizes = [2, 32], strides = [1, 1]} : vector<2x96xf32> to vector<2x32xf32>
    %99 = vector.extract_strided_slice %96 {offsets = [0, 64], sizes = [2, 32], strides = [1, 1]} : vector<2x96xf32> to vector<2x32xf32>
    %100 = arith.mulf %97, %98 : vector<2x32xf32>
    %101 = arith.mulf %86, %99 : vector<2x32xf32>
    %102 = arith.addf %100, %101 : vector<2x32xf32>
    %c1_67 = arith.constant 1 : index
    %c2_68 = arith.constant 2 : index
    %c0_69 = arith.constant 0 : index
    %c0_70 = arith.constant 0 : index
    %103 = vector.load %arg4[%c1_67, %c2_68, %c0_69, %c0_70] : memref<8x3x2x32xf32, #tpu.memory_space<vmem>>, vector<1x1x2x32xf32>
    %104 = vector.shape_cast %103 : vector<1x1x2x32xf32> to vector<2x32xf32>
    %105 = vector.shape_cast %102 : vector<2x32xf32> to vector<1x1x2x32xf32>
    tpu.vector_store %arg4[%c1_67, %c2_68, %c0_69, %c0_70], %105 {strides = array<i32>} : memref<8x3x2x32xf32, #tpu.memory_space<vmem>>, vector<1x1x2x32xf32>,
    %c2_71 = arith.constant 2 : index
    %c0_72 = arith.constant 0 : index
    %c0_73 = arith.constant 0 : index
    %106 = vector.load %arg1[%c2_71, %c0_72, %c0_73] : memref<8x2x96xf32, #tpu.memory_space<vmem>>, vector<1x2x96xf32>
    %107 = vector.shape_cast %106 : vector<1x2x96xf32> to vector<2x96xf32>
    %c0_74 = arith.constant 0 : index
    %c0_75 = arith.constant 0 : index
    %c0_76 = arith.constant 0 : index
    %108 = vector.load %arg2[%c0_74, %c0_75, %c0_76] : memref<3x32x96xf32, #tpu.memory_space<vmem>>, vector<1x32x96xf32>
    %109 = vector.shape_cast %108 : vector<1x32x96xf32> to vector<32x96xf32>
    %cst_77 = arith.constant dense<0.000000e+00> : vector<2x96xf32>
    %110 = tpu.matmul %102, %109, %cst_77 {dimension_numbers = #tpu.dot_dimension_numbers<[1], [0], [0], [1], [0, 0, 1, 1], [], []>} : vector<2x32xf32>, vector<32x96xf32>, vector<2x96xf32> -> vector<2x96xf32>
    %c0_78 = arith.constant 0 : index
    %c0_79 = arith.constant 0 : index
    %c0_80 = arith.constant 0 : index
    %111 = vector.load %arg3[%c0_78, %c0_79, %c0_80] : memref<3x1x96xf32, #tpu.memory_space<vmem>>, vector<1x1x96xf32>
    %112 = vector.shape_cast %111 : vector<1x1x96xf32> to vector<1x96xf32>
    %113 = vector.broadcast %112 : vector<1x96xf32> to vector<2x96xf32>
    %114 = arith.addf %110, %113 : vector<2x96xf32>
    %115 = arith.addf %114, %107 : vector<2x96xf32>
    %116 = vector.extract_strided_slice %115 {offsets = [0, 0], sizes = [2, 32], strides = [1, 1]} : vector<2x96xf32> to vector<2x32xf32>
    %117 = vector.extract_strided_slice %115 {offsets = [0, 32], sizes = [2, 32], strides = [1, 1]} : vector<2x96xf32> to vector<2x32xf32>
    %118 = vector.extract_strided_slice %115 {offsets = [0, 64], sizes = [2, 32], strides = [1, 1]} : vector<2x96xf32> to vector<2x32xf32>
    %119 = arith.mulf %116, %117 : vector<2x32xf32>
    %120 = arith.mulf %102, %118 : vector<2x32xf32>
    %121 = arith.addf %119, %120 : vector<2x32xf32>
    %c2_81 = arith.constant 2 : index
    %c0_82 = arith.constant 0 : index
    %c0_83 = arith.constant 0 : index
    %c0_84 = arith.constant 0 : index
    %122 = vector.load %arg4[%c2_81, %c0_82, %c0_83, %c0_84] : memref<8x3x2x32xf32, #tpu.memory_space<vmem>>, vector<1x1x2x32xf32>
    %123 = vector.shape_cast %122 : vector<1x1x2x32xf32> to vector<2x32xf32>
    %124 = vector.shape_cast %121 : vector<2x32xf32> to vector<1x1x2x32xf32>
    tpu.vector_store %arg4[%c2_81, %c0_82, %c0_83, %c0_84], %124 {strides = array<i32>} : memref<8x3x2x32xf32, #tpu.memory_space<vmem>>, vector<1x1x2x32xf32>,
    %c1_85 = arith.constant 1 : index
    %c0_86 = arith.constant 0 : index
    %c0_87 = arith.constant 0 : index
    %125 = vector.load %arg2[%c1_85, %c0_86, %c0_87] : memref<3x32x96xf32, #tpu.memory_space<vmem>>, vector<1x32x96xf32>
    %126 = vector.shape_cast %125 : vector<1x32x96xf32> to vector<32x96xf32>
    %cst_88 = arith.constant dense<0.000000e+00> : vector<2x96xf32>
    %127 = tpu.matmul %121, %126, %cst_88 {dimension_numbers = #tpu.dot_dimension_numbers<[1], [0], [0], [1], [0, 0, 1, 1], [], []>} : vector<2x32xf32>, vector<32x96xf32>, vector<2x96xf32> -> vector<2x96xf32>
    %c1_89 = arith.constant 1 : index
    %c0_90 = arith.constant 0 : index
    %c0_91 = arith.constant 0 : index
    %128 = vector.load %arg3[%c1_89, %c0_90, %c0_91] : memref<3x1x96xf32, #tpu.memory_space<vmem>>, vector<1x1x96xf32>
    %129 = vector.shape_cast %128 : vector<1x1x96xf32> to vector<1x96xf32>
    %130 = vector.broadcast %129 : vector<1x96xf32> to vector<2x96xf32>
    %131 = arith.addf %127, %130 : vector<2x96xf32>
    %132 = vector.extract_strided_slice %131 {offsets = [0, 0], sizes = [2, 32], strides = [1, 1]} : vector<2x96xf32> to vector<2x32xf32>
    %133 = vector.extract_strided_slice %131 {offsets = [0, 32], sizes = [2, 32], strides = [1, 1]} : vector<2x96xf32> to vector<2x32xf32>
    %134 = vector.extract_strided_slice %131 {offsets = [0, 64], sizes = [2, 32], strides = [1, 1]} : vector<2x96xf32> to vector<2x32xf32>
    %135 = arith.mulf %132, %133 : vector<2x32xf32>
    %136 = arith.mulf %121, %134 : vector<2x32xf32>
    %137 = arith.addf %135, %136 : vector<2x32xf32>
    %c2_92 = arith.constant 2 : index
    %c1_93 = arith.constant 1 : index
    %c0_94 = arith.constant 0 : index
    %c0_95 = arith.constant 0 : index
    %138 = vector.load %arg4[%c2_92, %c1_93, %c0_94, %c0_95] : memref<8x3x2x32xf32, #tpu.memory_space<vmem>>, vector<1x1x2x32xf32>
    %139 = vector.shape_cast %138 : vector<1x1x2x32xf32> to vector<2x32xf32>
    %140 = vector.shape_cast %137 : vector<2x32xf32> to vector<1x1x2x32xf32>
    tpu.vector_store %arg4[%c2_92, %c1_93, %c0_94, %c0_95], %140 {strides = array<i32>} : memref<8x3x2x32xf32, #tpu.memory_space<vmem>>, vector<1x1x2x32xf32>,
    %c2_96 = arith.constant 2 : index
    %c0_97 = arith.constant 0 : index
    %c0_98 = arith.constant 0 : index
    %141 = vector.load %arg2[%c2_96, %c0_97, %c0_98] : memref<3x32x96xf32, #tpu.memory_space<vmem>>, vector<1x32x96xf32>
    %142 = vector.shape_cast %141 : vector<1x32x96xf32> to vector<32x96xf32>
    %cst_99 = arith.constant dense<0.000000e+00> : vector<2x96xf32>
    %143 = tpu.matmul %137, %142, %cst_99 {dimension_numbers = #tpu.dot_dimension_numbers<[1], [0], [0], [1], [0, 0, 1, 1], [], []>} : vector<2x32xf32>, vector<32x96xf32>, vector<2x96xf32> -> vector<2x96xf32>
    %c2_100 = arith.constant 2 : index
    %c0_101 = arith.constant 0 : index
    %c0_102 = arith.constant 0 : index
    %144 = vector.load %arg3[%c2_100, %c0_101, %c0_102] : memref<3x1x96xf32, #tpu.memory_space<vmem>>, vector<1x1x96xf32>
    %145 = vector.shape_cast %144 : vector<1x1x96xf32> to vector<1x96xf32>
    %146 = vector.broadcast %145 : vector<1x96xf32> to vector<2x96xf32>
    %147 = arith.addf %143, %146 : vector<2x96xf32>
    %148 = vector.extract_strided_slice %147 {offsets = [0, 0], sizes = [2, 32], strides = [1, 1]} : vector<2x96xf32> to vector<2x32xf32>
    %149 = vector.extract_strided_slice %147 {offsets = [0, 32], sizes = [2, 32], strides = [1, 1]} : vector<2x96xf32> to vector<2x32xf32>
    %150 = vector.extract_strided_slice %147 {offsets = [0, 64], sizes = [2, 32], strides = [1, 1]} : vector<2x96xf32> to vector<2x32xf32>
    %151 = arith.mulf %148, %149 : vector<2x32xf32>
    %152 = arith.mulf %137, %150 : vector<2x32xf32>
    %153 = arith.addf %151, %152 : vector<2x32xf32>
    %c2_103 = arith.constant 2 : index
    %c2_104 = arith.constant 2 : index
    %c0_105 = arith.constant 0 : index
    %c0_106 = arith.constant 0 : index
    %154 = vector.load %arg4[%c2_103, %c2_104, %c0_105, %c0_106] : memref<8x3x2x32xf32, #tpu.memory_space<vmem>>, vector<1x1x2x32xf32>
    %155 = vector.shape_cast %154 : vector<1x1x2x32xf32> to vector<2x32xf32>
    %156 = vector.shape_cast %153 : vector<2x32xf32> to vector<1x1x2x32xf32>
    tpu.vector_store %arg4[%c2_103, %c2_104, %c0_105, %c0_106], %156 {strides = array<i32>} : memref<8x3x2x32xf32, #tpu.memory_space<vmem>>, vector<1x1x2x32xf32>,
    %c3 = arith.constant 3 : index
    %c0_107 = arith.constant 0 : index
    %c0_108 = arith.constant 0 : index
    %157 = vector.load %arg1[%c3, %c0_107, %c0_108] : memref<8x2x96xf32, #tpu.memory_space<vmem>>, vector<1x2x96xf32>
    %158 = vector.shape_cast %157 : vector<1x2x96xf32> to vector<2x96xf32>
    %c0_109 = arith.constant 0 : index
    %c0_110 = arith.constant 0 : index
    %c0_111 = arith.constant 0 : index
    %159 = vector.load %arg2[%c0_109, %c0_110, %c0_111] : memref<3x32x96xf32, #tpu.memory_space<vmem>>, vector<1x32x96xf32>
    %160 = vector.shape_cast %159 : vector<1x32x96xf32> to vector<32x96xf32>
    %cst_112 = arith.constant dense<0.000000e+00> : vector<2x96xf32>
    %161 = tpu.matmul %153, %160, %cst_112 {dimension_numbers = #tpu.dot_dimension_numbers<[1], [0], [0], [1], [0, 0, 1, 1], [], []>} : vector<2x32xf32>, vector<32x96xf32>, vector<2x96xf32> -> vector<2x96xf32>
    %c0_113 = arith.constant 0 : index
    %c0_114 = arith.constant 0 : index
    %c0_115 = arith.constant 0 : index
    %162 = vector.load %arg3[%c0_113, %c0_114, %c0_115] : memref<3x1x96xf32, #tpu.memory_space<vmem>>, vector<1x1x96xf32>
    %163 = vector.shape_cast %162 : vector<1x1x96xf32> to vector<1x96xf32>
    %164 = vector.broadcast %163 : vector<1x96xf32> to vector<2x96xf32>
    %165 = arith.addf %161, %164 : vector<2x96xf32>
    %166 = arith.addf %165, %158 : vector<2x96xf32>
    %167 = vector.extract_strided_slice %166 {offsets = [0, 0], sizes = [2, 32], strides = [1, 1]} : vector<2x96xf32> to vector<2x32xf32>
    %168 = vector.extract_strided_slice %166 {offsets = [0, 32], sizes = [2, 32], strides = [1, 1]} : vector<2x96xf32> to vector<2x32xf32>
    %169 = vector.extract_strided_slice %166 {offsets = [0, 64], sizes = [2, 32], strides = [1, 1]} : vector<2x96xf32> to vector<2x32xf32>
    %170 = arith.mulf %167, %168 : vector<2x32xf32>
    %171 = arith.mulf %153, %169 : vector<2x32xf32>
    %172 = arith.addf %170, %171 : vector<2x32xf32>
    %c3_116 = arith.constant 3 : index
    %c0_117 = arith.constant 0 : index
    %c0_118 = arith.constant 0 : index
    %c0_119 = arith.constant 0 : index
    %173 = vector.load %arg4[%c3_116, %c0_117, %c0_118, %c0_119] : memref<8x3x2x32xf32, #tpu.memory_space<vmem>>, vector<1x1x2x32xf32>
    %174 = vector.shape_cast %173 : vector<1x1x2x32xf32> to vector<2x32xf32>
    %175 = vector.shape_cast %172 : vector<2x32xf32> to vector<1x1x2x32xf32>
    tpu.vector_store %arg4[%c3_116, %c0_117, %c0_118, %c0_119], %175 {strides = array<i32>} : memref<8x3x2x32xf32, #tpu.memory_space<vmem>>, vector<1x1x2x32xf32>,
    %c1_120 = arith.constant 1 : index
    %c0_121 = arith.constant 0 : index
    %c0_122 = arith.constant 0 : index
    %176 = vector.load %arg2[%c1_120, %c0_121, %c0_122] : memref<3x32x96xf32, #tpu.memory_space<vmem>>, vector<1x32x96xf32>
    %177 = vector.shape_cast %176 : vector<1x32x96xf32> to vector<32x96xf32>
    %cst_123 = arith.constant dense<0.000000e+00> : vector<2x96xf32>
    %178 = tpu.matmul %172, %177, %cst_123 {dimension_numbers = #tpu.dot_dimension_numbers<[1], [0], [0], [1], [0, 0, 1, 1], [], []>} : vector<2x32xf32>, vector<32x96xf32>, vector<2x96xf32> -> vector<2x96xf32>
    %c1_124 = arith.constant 1 : index
    %c0_125 = arith.constant 0 : index
    %c0_126 = arith.constant 0 : index
    %179 = vector.load %arg3[%c1_124, %c0_125, %c0_126] : memref<3x1x96xf32, #tpu.memory_space<vmem>>, vector<1x1x96xf32>
    %180 = vector.shape_cast %179 : vector<1x1x96xf32> to vector<1x96xf32>
    %181 = vector.broadcast %180 : vector<1x96xf32> to vector<2x96xf32>
    %182 = arith.addf %178, %181 : vector<2x96xf32>
    %183 = vector.extract_strided_slice %182 {offsets = [0, 0], sizes = [2, 32], strides = [1, 1]} : vector<2x96xf32> to vector<2x32xf32>
    %184 = vector.extract_strided_slice %182 {offsets = [0, 32], sizes = [2, 32], strides = [1, 1]} : vector<2x96xf32> to vector<2x32xf32>
    %185 = vector.extract_strided_slice %182 {offsets = [0, 64], sizes = [2, 32], strides = [1, 1]} : vector<2x96xf32> to vector<2x32xf32>
    %186 = arith.mulf %183, %184 : vector<2x32xf32>
    %187 = arith.mulf %172, %185 : vector<2x32xf32>
    %188 = arith.addf %186, %187 : vector<2x32xf32>
    %c3_127 = arith.constant 3 : index
    %c1_128 = arith.constant 1 : index
    %c0_129 = arith.constant 0 : index
    %c0_130 = arith.constant 0 : index
    %189 = vector.load %arg4[%c3_127, %c1_128, %c0_129, %c0_130] : memref<8x3x2x32xf32, #tpu.memory_space<vmem>>, vector<1x1x2x32xf32>
    %190 = vector.shape_cast %189 : vector<1x1x2x32xf32> to vector<2x32xf32>
    %191 = vector.shape_cast %188 : vector<2x32xf32> to vector<1x1x2x32xf32>
    tpu.vector_store %arg4[%c3_127, %c1_128, %c0_129, %c0_130], %191 {strides = array<i32>} : memref<8x3x2x32xf32, #tpu.memory_space<vmem>>, vector<1x1x2x32xf32>,
    %c2_131 = arith.constant 2 : index
    %c0_132 = arith.constant 0 : index
    %c0_133 = arith.constant 0 : index
    %192 = vector.load %arg2[%c2_131, %c0_132, %c0_133] : memref<3x32x96xf32, #tpu.memory_space<vmem>>, vector<1x32x96xf32>
    %193 = vector.shape_cast %192 : vector<1x32x96xf32> to vector<32x96xf32>
    %cst_134 = arith.constant dense<0.000000e+00> : vector<2x96xf32>
    %194 = tpu.matmul %188, %193, %cst_134 {dimension_numbers = #tpu.dot_dimension_numbers<[1], [0], [0], [1], [0, 0, 1, 1], [], []>} : vector<2x32xf32>, vector<32x96xf32>, vector<2x96xf32> -> vector<2x96xf32>
    %c2_135 = arith.constant 2 : index
    %c0_136 = arith.constant 0 : index
    %c0_137 = arith.constant 0 : index
    %195 = vector.load %arg3[%c2_135, %c0_136, %c0_137] : memref<3x1x96xf32, #tpu.memory_space<vmem>>, vector<1x1x96xf32>
    %196 = vector.shape_cast %195 : vector<1x1x96xf32> to vector<1x96xf32>
    %197 = vector.broadcast %196 : vector<1x96xf32> to vector<2x96xf32>
    %198 = arith.addf %194, %197 : vector<2x96xf32>
    %199 = vector.extract_strided_slice %198 {offsets = [0, 0], sizes = [2, 32], strides = [1, 1]} : vector<2x96xf32> to vector<2x32xf32>
    %200 = vector.extract_strided_slice %198 {offsets = [0, 32], sizes = [2, 32], strides = [1, 1]} : vector<2x96xf32> to vector<2x32xf32>
    %201 = vector.extract_strided_slice %198 {offsets = [0, 64], sizes = [2, 32], strides = [1, 1]} : vector<2x96xf32> to vector<2x32xf32>
    %202 = arith.mulf %199, %200 : vector<2x32xf32>
    %203 = arith.mulf %188, %201 : vector<2x32xf32>
    %204 = arith.addf %202, %203 : vector<2x32xf32>
    %c3_138 = arith.constant 3 : index
    %c2_139 = arith.constant 2 : index
    %c0_140 = arith.constant 0 : index
    %c0_141 = arith.constant 0 : index
    %205 = vector.load %arg4[%c3_138, %c2_139, %c0_140, %c0_141] : memref<8x3x2x32xf32, #tpu.memory_space<vmem>>, vector<1x1x2x32xf32>
    %206 = vector.shape_cast %205 : vector<1x1x2x32xf32> to vector<2x32xf32>
    %207 = vector.shape_cast %204 : vector<2x32xf32> to vector<1x1x2x32xf32>
    tpu.vector_store %arg4[%c3_138, %c2_139, %c0_140, %c0_141], %207 {strides = array<i32>} : memref<8x3x2x32xf32, #tpu.memory_space<vmem>>, vector<1x1x2x32xf32>,
    %c4 = arith.constant 4 : index
    %c0_142 = arith.constant 0 : index
    %c0_143 = arith.constant 0 : index
    %208 = vector.load %arg1[%c4, %c0_142, %c0_143] : memref<8x2x96xf32, #tpu.memory_space<vmem>>, vector<1x2x96xf32>
    %209 = vector.shape_cast %208 : vector<1x2x96xf32> to vector<2x96xf32>
    %c0_144 = arith.constant 0 : index
    %c0_145 = arith.constant 0 : index
    %c0_146 = arith.constant 0 : index
    %210 = vector.load %arg2[%c0_144, %c0_145, %c0_146] : memref<3x32x96xf32, #tpu.memory_space<vmem>>, vector<1x32x96xf32>
    %211 = vector.shape_cast %210 : vector<1x32x96xf32> to vector<32x96xf32>
    %cst_147 = arith.constant dense<0.000000e+00> : vector<2x96xf32>
    %212 = tpu.matmul %204, %211, %cst_147 {dimension_numbers = #tpu.dot_dimension_numbers<[1], [0], [0], [1], [0, 0, 1, 1], [], []>} : vector<2x32xf32>, vector<32x96xf32>, vector<2x96xf32> -> vector<2x96xf32>
    %c0_148 = arith.constant 0 : index
    %c0_149 = arith.constant 0 : index
    %c0_150 = arith.constant 0 : index
    %213 = vector.load %arg3[%c0_148, %c0_149, %c0_150] : memref<3x1x96xf32, #tpu.memory_space<vmem>>, vector<1x1x96xf32>
    %214 = vector.shape_cast %213 : vector<1x1x96xf32> to vector<1x96xf32>
    %215 = vector.broadcast %214 : vector<1x96xf32> to vector<2x96xf32>
    %216 = arith.addf %212, %215 : vector<2x96xf32>
    %217 = arith.addf %216, %209 : vector<2x96xf32>
    %218 = vector.extract_strided_slice %217 {offsets = [0, 0], sizes = [2, 32], strides = [1, 1]} : vector<2x96xf32> to vector<2x32xf32>
    %219 = vector.extract_strided_slice %217 {offsets = [0, 32], sizes = [2, 32], strides = [1, 1]} : vector<2x96xf32> to vector<2x32xf32>
    %220 = vector.extract_strided_slice %217 {offsets = [0, 64], sizes = [2, 32], strides = [1, 1]} : vector<2x96xf32> to vector<2x32xf32>
    %221 = arith.mulf %218, %219 : vector<2x32xf32>
    %222 = arith.mulf %204, %220 : vector<2x32xf32>
    %223 = arith.addf %221, %222 : vector<2x32xf32>
    %c4_151 = arith.constant 4 : index
    %c0_152 = arith.constant 0 : index
    %c0_153 = arith.constant 0 : index
    %c0_154 = arith.constant 0 : index
    %224 = vector.load %arg4[%c4_151, %c0_152, %c0_153, %c0_154] : memref<8x3x2x32xf32, #tpu.memory_space<vmem>>, vector<1x1x2x32xf32>
    %225 = vector.shape_cast %224 : vector<1x1x2x32xf32> to vector<2x32xf32>
    %226 = vector.shape_cast %223 : vector<2x32xf32> to vector<1x1x2x32xf32>
    tpu.vector_store %arg4[%c4_151, %c0_152, %c0_153, %c0_154], %226 {strides = array<i32>} : memref<8x3x2x32xf32, #tpu.memory_space<vmem>>, vector<1x1x2x32xf32>,
    %c1_155 = arith.constant 1 : index
    %c0_156 = arith.constant 0 : index
    %c0_157 = arith.constant 0 : index
    %227 = vector.load %arg2[%c1_155, %c0_156, %c0_157] : memref<3x32x96xf32, #tpu.memory_space<vmem>>, vector<1x32x96xf32>
    %228 = vector.shape_cast %227 : vector<1x32x96xf32> to vector<32x96xf32>
    %cst_158 = arith.constant dense<0.000000e+00> : vector<2x96xf32>
    %229 = tpu.matmul %223, %228, %cst_158 {dimension_numbers = #tpu.dot_dimension_numbers<[1], [0], [0], [1], [0, 0, 1, 1], [], []>} : vector<2x32xf32>, vector<32x96xf32>, vector<2x96xf32> -> vector<2x96xf32>
    %c1_159 = arith.constant 1 : index
    %c0_160 = arith.constant 0 : index
    %c0_161 = arith.constant 0 : index
    %230 = vector.load %arg3[%c1_159, %c0_160, %c0_161] : memref<3x1x96xf32, #tpu.memory_space<vmem>>, vector<1x1x96xf32>
    %231 = vector.shape_cast %230 : vector<1x1x96xf32> to vector<1x96xf32>
    %232 = vector.broadcast %231 : vector<1x96xf32> to vector<2x96xf32>
    %233 = arith.addf %229, %232 : vector<2x96xf32>
    %234 = vector.extract_strided_slice %233 {offsets = [0, 0], sizes = [2, 32], strides = [1, 1]} : vector<2x96xf32> to vector<2x32xf32>
    %235 = vector.extract_strided_slice %233 {offsets = [0, 32], sizes = [2, 32], strides = [1, 1]} : vector<2x96xf32> to vector<2x32xf32>
    %236 = vector.extract_strided_slice %233 {offsets = [0, 64], sizes = [2, 32], strides = [1, 1]} : vector<2x96xf32> to vector<2x32xf32>
    %237 = arith.mulf %234, %235 : vector<2x32xf32>
    %238 = arith.mulf %223, %236 : vector<2x32xf32>
    %239 = arith.addf %237, %238 : vector<2x32xf32>
    %c4_162 = arith.constant 4 : index
    %c1_163 = arith.constant 1 : index
    %c0_164 = arith.constant 0 : index
    %c0_165 = arith.constant 0 : index
    %240 = vector.load %arg4[%c4_162, %c1_163, %c0_164, %c0_165] : memref<8x3x2x32xf32, #tpu.memory_space<vmem>>, vector<1x1x2x32xf32>
    %241 = vector.shape_cast %240 : vector<1x1x2x32xf32> to vector<2x32xf32>
    %242 = vector.shape_cast %239 : vector<2x32xf32> to vector<1x1x2x32xf32>
    tpu.vector_store %arg4[%c4_162, %c1_163, %c0_164, %c0_165], %242 {strides = array<i32>} : memref<8x3x2x32xf32, #tpu.memory_space<vmem>>, vector<1x1x2x32xf32>,
    %c2_166 = arith.constant 2 : index
    %c0_167 = arith.constant 0 : index
    %c0_168 = arith.constant 0 : index
    %243 = vector.load %arg2[%c2_166, %c0_167, %c0_168] : memref<3x32x96xf32, #tpu.memory_space<vmem>>, vector<1x32x96xf32>
    %244 = vector.shape_cast %243 : vector<1x32x96xf32> to vector<32x96xf32>
    %cst_169 = arith.constant dense<0.000000e+00> : vector<2x96xf32>
    %245 = tpu.matmul %239, %244, %cst_169 {dimension_numbers = #tpu.dot_dimension_numbers<[1], [0], [0], [1], [0, 0, 1, 1], [], []>} : vector<2x32xf32>, vector<32x96xf32>, vector<2x96xf32> -> vector<2x96xf32>
    %c2_170 = arith.constant 2 : index
    %c0_171 = arith.constant 0 : index
    %c0_172 = arith.constant 0 : index
    %246 = vector.load %arg3[%c2_170, %c0_171, %c0_172] : memref<3x1x96xf32, #tpu.memory_space<vmem>>, vector<1x1x96xf32>
    %247 = vector.shape_cast %246 : vector<1x1x96xf32> to vector<1x96xf32>
    %248 = vector.broadcast %247 : vector<1x96xf32> to vector<2x96xf32>
    %249 = arith.addf %245, %248 : vector<2x96xf32>
    %250 = vector.extract_strided_slice %249 {offsets = [0, 0], sizes = [2, 32], strides = [1, 1]} : vector<2x96xf32> to vector<2x32xf32>
    %251 = vector.extract_strided_slice %249 {offsets = [0, 32], sizes = [2, 32], strides = [1, 1]} : vector<2x96xf32> to vector<2x32xf32>
    %252 = vector.extract_strided_slice %249 {offsets = [0, 64], sizes = [2, 32], strides = [1, 1]} : vector<2x96xf32> to vector<2x32xf32>
    %253 = arith.mulf %250, %251 : vector<2x32xf32>
    %254 = arith.mulf %239, %252 : vector<2x32xf32>
    %255 = arith.addf %253, %254 : vector<2x32xf32>
    %c4_173 = arith.constant 4 : index
    %c2_174 = arith.constant 2 : index
    %c0_175 = arith.constant 0 : index
    %c0_176 = arith.constant 0 : index
    %256 = vector.load %arg4[%c4_173, %c2_174, %c0_175, %c0_176] : memref<8x3x2x32xf32, #tpu.memory_space<vmem>>, vector<1x1x2x32xf32>
    %257 = vector.shape_cast %256 : vector<1x1x2x32xf32> to vector<2x32xf32>
    %258 = vector.shape_cast %255 : vector<2x32xf32> to vector<1x1x2x32xf32>
    tpu.vector_store %arg4[%c4_173, %c2_174, %c0_175, %c0_176], %258 {strides = array<i32>} : memref<8x3x2x32xf32, #tpu.memory_space<vmem>>, vector<1x1x2x32xf32>,
    %c5 = arith.constant 5 : index
    %c0_177 = arith.constant 0 : index
    %c0_178 = arith.constant 0 : index
    %259 = vector.load %arg1[%c5, %c0_177, %c0_178] : memref<8x2x96xf32, #tpu.memory_space<vmem>>, vector<1x2x96xf32>
    %260 = vector.shape_cast %259 : vector<1x2x96xf32> to vector<2x96xf32>
    %c0_179 = arith.constant 0 : index
    %c0_180 = arith.constant 0 : index
    %c0_181 = arith.constant 0 : index
    %261 = vector.load %arg2[%c0_179, %c0_180, %c0_181] : memref<3x32x96xf32, #tpu.memory_space<vmem>>, vector<1x32x96xf32>
    %262 = vector.shape_cast %261 : vector<1x32x96xf32> to vector<32x96xf32>
    %cst_182 = arith.constant dense<0.000000e+00> : vector<2x96xf32>
    %263 = tpu.matmul %255, %262, %cst_182 {dimension_numbers = #tpu.dot_dimension_numbers<[1], [0], [0], [1], [0, 0, 1, 1], [], []>} : vector<2x32xf32>, vector<32x96xf32>, vector<2x96xf32> -> vector<2x96xf32>
    %c0_183 = arith.constant 0 : index
    %c0_184 = arith.constant 0 : index
    %c0_185 = arith.constant 0 : index
    %264 = vector.load %arg3[%c0_183, %c0_184, %c0_185] : memref<3x1x96xf32, #tpu.memory_space<vmem>>, vector<1x1x96xf32>
    %265 = vector.shape_cast %264 : vector<1x1x96xf32> to vector<1x96xf32>
    %266 = vector.broadcast %265 : vector<1x96xf32> to vector<2x96xf32>
    %267 = arith.addf %263, %266 : vector<2x96xf32>
    %268 = arith.addf %267, %260 : vector<2x96xf32>
    %269 = vector.extract_strided_slice %268 {offsets = [0, 0], sizes = [2, 32], strides = [1, 1]} : vector<2x96xf32> to vector<2x32xf32>
    %270 = vector.extract_strided_slice %268 {offsets = [0, 32], sizes = [2, 32], strides = [1, 1]} : vector<2x96xf32> to vector<2x32xf32>
    %271 = vector.extract_strided_slice %268 {offsets = [0, 64], sizes = [2, 32], strides = [1, 1]} : vector<2x96xf32> to vector<2x32xf32>
    %272 = arith.mulf %269, %270 : vector<2x32xf32>
    %273 = arith.mulf %255, %271 : vector<2x32xf32>
    %274 = arith.addf %272, %273 : vector<2x32xf32>
    %c5_186 = arith.constant 5 : index
    %c0_187 = arith.constant 0 : index
    %c0_188 = arith.constant 0 : index
    %c0_189 = arith.constant 0 : index
    %275 = vector.load %arg4[%c5_186, %c0_187, %c0_188, %c0_189] : memref<8x3x2x32xf32, #tpu.memory_space<vmem>>, vector<1x1x2x32xf32>
    %276 = vector.shape_cast %275 : vector<1x1x2x32xf32> to vector<2x32xf32>
    %277 = vector.shape_cast %274 : vector<2x32xf32> to vector<1x1x2x32xf32>
    tpu.vector_store %arg4[%c5_186, %c0_187, %c0_188, %c0_189], %277 {strides = array<i32>} : memref<8x3x2x32xf32, #tpu.memory_space<vmem>>, vector<1x1x2x32xf32>,
    %c1_190 = arith.constant 1 : index
    %c0_191 = arith.constant 0 : index
    %c0_192 = arith.constant 0 : index
    %278 = vector.load %arg2[%c1_190, %c0_191, %c0_192] : memref<3x32x96xf32, #tpu.memory_space<vmem>>, vector<1x32x96xf32>
    %279 = vector.shape_cast %278 : vector<1x32x96xf32> to vector<32x96xf32>
    %cst_193 = arith.constant dense<0.000000e+00> : vector<2x96xf32>
    %280 = tpu.matmul %274, %279, %cst_193 {dimension_numbers = #tpu.dot_dimension_numbers<[1], [0], [0], [1], [0, 0, 1, 1], [], []>} : vector<2x32xf32>, vector<32x96xf32>, vector<2x96xf32> -> vector<2x96xf32>
    %c1_194 = arith.constant 1 : index
    %c0_195 = arith.constant 0 : index
    %c0_196 = arith.constant 0 : index
    %281 = vector.load %arg3[%c1_194, %c0_195, %c0_196] : memref<3x1x96xf32, #tpu.memory_space<vmem>>, vector<1x1x96xf32>
    %282 = vector.shape_cast %281 : vector<1x1x96xf32> to vector<1x96xf32>
    %283 = vector.broadcast %282 : vector<1x96xf32> to vector<2x96xf32>
    %284 = arith.addf %280, %283 : vector<2x96xf32>
    %285 = vector.extract_strided_slice %284 {offsets = [0, 0], sizes = [2, 32], strides = [1, 1]} : vector<2x96xf32> to vector<2x32xf32>
    %286 = vector.extract_strided_slice %284 {offsets = [0, 32], sizes = [2, 32], strides = [1, 1]} : vector<2x96xf32> to vector<2x32xf32>
    %287 = vector.extract_strided_slice %284 {offsets = [0, 64], sizes = [2, 32], strides = [1, 1]} : vector<2x96xf32> to vector<2x32xf32>
    %288 = arith.mulf %285, %286 : vector<2x32xf32>
    %289 = arith.mulf %274, %287 : vector<2x32xf32>
    %290 = arith.addf %288, %289 : vector<2x32xf32>
    %c5_197 = arith.constant 5 : index
    %c1_198 = arith.constant 1 : index
    %c0_199 = arith.constant 0 : index
    %c0_200 = arith.constant 0 : index
    %291 = vector.load %arg4[%c5_197, %c1_198, %c0_199, %c0_200] : memref<8x3x2x32xf32, #tpu.memory_space<vmem>>, vector<1x1x2x32xf32>
    %292 = vector.shape_cast %291 : vector<1x1x2x32xf32> to vector<2x32xf32>
    %293 = vector.shape_cast %290 : vector<2x32xf32> to vector<1x1x2x32xf32>
    tpu.vector_store %arg4[%c5_197, %c1_198, %c0_199, %c0_200], %293 {strides = array<i32>} : memref<8x3x2x32xf32, #tpu.memory_space<vmem>>, vector<1x1x2x32xf32>,
    %c2_201 = arith.constant 2 : index
    %c0_202 = arith.constant 0 : index
    %c0_203 = arith.constant 0 : index
    %294 = vector.load %arg2[%c2_201, %c0_202, %c0_203] : memref<3x32x96xf32, #tpu.memory_space<vmem>>, vector<1x32x96xf32>
    %295 = vector.shape_cast %294 : vector<1x32x96xf32> to vector<32x96xf32>
    %cst_204 = arith.constant dense<0.000000e+00> : vector<2x96xf32>
    %296 = tpu.matmul %290, %295, %cst_204 {dimension_numbers = #tpu.dot_dimension_numbers<[1], [0], [0], [1], [0, 0, 1, 1], [], []>} : vector<2x32xf32>, vector<32x96xf32>, vector<2x96xf32> -> vector<2x96xf32>
    %c2_205 = arith.constant 2 : index
    %c0_206 = arith.constant 0 : index
    %c0_207 = arith.constant 0 : index
    %297 = vector.load %arg3[%c2_205, %c0_206, %c0_207] : memref<3x1x96xf32, #tpu.memory_space<vmem>>, vector<1x1x96xf32>
    %298 = vector.shape_cast %297 : vector<1x1x96xf32> to vector<1x96xf32>
    %299 = vector.broadcast %298 : vector<1x96xf32> to vector<2x96xf32>
    %300 = arith.addf %296, %299 : vector<2x96xf32>
    %301 = vector.extract_strided_slice %300 {offsets = [0, 0], sizes = [2, 32], strides = [1, 1]} : vector<2x96xf32> to vector<2x32xf32>
    %302 = vector.extract_strided_slice %300 {offsets = [0, 32], sizes = [2, 32], strides = [1, 1]} : vector<2x96xf32> to vector<2x32xf32>
    %303 = vector.extract_strided_slice %300 {offsets = [0, 64], sizes = [2, 32], strides = [1, 1]} : vector<2x96xf32> to vector<2x32xf32>
    %304 = arith.mulf %301, %302 : vector<2x32xf32>
    %305 = arith.mulf %290, %303 : vector<2x32xf32>
    %306 = arith.addf %304, %305 : vector<2x32xf32>
    %c5_208 = arith.constant 5 : index
    %c2_209 = arith.constant 2 : index
    %c0_210 = arith.constant 0 : index
    %c0_211 = arith.constant 0 : index
    %307 = vector.load %arg4[%c5_208, %c2_209, %c0_210, %c0_211] : memref<8x3x2x32xf32, #tpu.memory_space<vmem>>, vector<1x1x2x32xf32>
    %308 = vector.shape_cast %307 : vector<1x1x2x32xf32> to vector<2x32xf32>
    %309 = vector.shape_cast %306 : vector<2x32xf32> to vector<1x1x2x32xf32>
    tpu.vector_store %arg4[%c5_208, %c2_209, %c0_210, %c0_211], %309 {strides = array<i32>} : memref<8x3x2x32xf32, #tpu.memory_space<vmem>>, vector<1x1x2x32xf32>,
    %c6 = arith.constant 6 : index
    %c0_212 = arith.constant 0 : index
    %c0_213 = arith.constant 0 : index
    %310 = vector.load %arg1[%c6, %c0_212, %c0_213] : memref<8x2x96xf32, #tpu.memory_space<vmem>>, vector<1x2x96xf32>
    %311 = vector.shape_cast %310 : vector<1x2x96xf32> to vector<2x96xf32>
    %c0_214 = arith.constant 0 : index
    %c0_215 = arith.constant 0 : index
    %c0_216 = arith.constant 0 : index
    %312 = vector.load %arg2[%c0_214, %c0_215, %c0_216] : memref<3x32x96xf32, #tpu.memory_space<vmem>>, vector<1x32x96xf32>
    %313 = vector.shape_cast %312 : vector<1x32x96xf32> to vector<32x96xf32>
    %cst_217 = arith.constant dense<0.000000e+00> : vector<2x96xf32>
    %314 = tpu.matmul %306, %313, %cst_217 {dimension_numbers = #tpu.dot_dimension_numbers<[1], [0], [0], [1], [0, 0, 1, 1], [], []>} : vector<2x32xf32>, vector<32x96xf32>, vector<2x96xf32> -> vector<2x96xf32>
    %c0_218 = arith.constant 0 : index
    %c0_219 = arith.constant 0 : index
    %c0_220 = arith.constant 0 : index
    %315 = vector.load %arg3[%c0_218, %c0_219, %c0_220] : memref<3x1x96xf32, #tpu.memory_space<vmem>>, vector<1x1x96xf32>
    %316 = vector.shape_cast %315 : vector<1x1x96xf32> to vector<1x96xf32>
    %317 = vector.broadcast %316 : vector<1x96xf32> to vector<2x96xf32>
    %318 = arith.addf %314, %317 : vector<2x96xf32>
    %319 = arith.addf %318, %311 : vector<2x96xf32>
    %320 = vector.extract_strided_slice %319 {offsets = [0, 0], sizes = [2, 32], strides = [1, 1]} : vector<2x96xf32> to vector<2x32xf32>
    %321 = vector.extract_strided_slice %319 {offsets = [0, 32], sizes = [2, 32], strides = [1, 1]} : vector<2x96xf32> to vector<2x32xf32>
    %322 = vector.extract_strided_slice %319 {offsets = [0, 64], sizes = [2, 32], strides = [1, 1]} : vector<2x96xf32> to vector<2x32xf32>
    %323 = arith.mulf %320, %321 : vector<2x32xf32>
    %324 = arith.mulf %306, %322 : vector<2x32xf32>
    %325 = arith.addf %323, %324 : vector<2x32xf32>
    %c6_221 = arith.constant 6 : index
    %c0_222 = arith.constant 0 : index
    %c0_223 = arith.constant 0 : index
    %c0_224 = arith.constant 0 : index
    %326 = vector.load %arg4[%c6_221, %c0_222, %c0_223, %c0_224] : memref<8x3x2x32xf32, #tpu.memory_space<vmem>>, vector<1x1x2x32xf32>
    %327 = vector.shape_cast %326 : vector<1x1x2x32xf32> to vector<2x32xf32>
    %328 = vector.shape_cast %325 : vector<2x32xf32> to vector<1x1x2x32xf32>
    tpu.vector_store %arg4[%c6_221, %c0_222, %c0_223, %c0_224], %328 {strides = array<i32>} : memref<8x3x2x32xf32, #tpu.memory_space<vmem>>, vector<1x1x2x32xf32>,
    %c1_225 = arith.constant 1 : index
    %c0_226 = arith.constant 0 : index
    %c0_227 = arith.constant 0 : index
    %329 = vector.load %arg2[%c1_225, %c0_226, %c0_227] : memref<3x32x96xf32, #tpu.memory_space<vmem>>, vector<1x32x96xf32>
    %330 = vector.shape_cast %329 : vector<1x32x96xf32> to vector<32x96xf32>
    %cst_228 = arith.constant dense<0.000000e+00> : vector<2x96xf32>
    %331 = tpu.matmul %325, %330, %cst_228 {dimension_numbers = #tpu.dot_dimension_numbers<[1], [0], [0], [1], [0, 0, 1, 1], [], []>} : vector<2x32xf32>, vector<32x96xf32>, vector<2x96xf32> -> vector<2x96xf32>
    %c1_229 = arith.constant 1 : index
    %c0_230 = arith.constant 0 : index
    %c0_231 = arith.constant 0 : index
    %332 = vector.load %arg3[%c1_229, %c0_230, %c0_231] : memref<3x1x96xf32, #tpu.memory_space<vmem>>, vector<1x1x96xf32>
    %333 = vector.shape_cast %332 : vector<1x1x96xf32> to vector<1x96xf32>
    %334 = vector.broadcast %333 : vector<1x96xf32> to vector<2x96xf32>
    %335 = arith.addf %331, %334 : vector<2x96xf32>
    %336 = vector.extract_strided_slice %335 {offsets = [0, 0], sizes = [2, 32], strides = [1, 1]} : vector<2x96xf32> to vector<2x32xf32>
    %337 = vector.extract_strided_slice %335 {offsets = [0, 32], sizes = [2, 32], strides = [1, 1]} : vector<2x96xf32> to vector<2x32xf32>
    %338 = vector.extract_strided_slice %335 {offsets = [0, 64], sizes = [2, 32], strides = [1, 1]} : vector<2x96xf32> to vector<2x32xf32>
    %339 = arith.mulf %336, %337 : vector<2x32xf32>
    %340 = arith.mulf %325, %338 : vector<2x32xf32>
    %341 = arith.addf %339, %340 : vector<2x32xf32>
    %c6_232 = arith.constant 6 : index
    %c1_233 = arith.constant 1 : index
    %c0_234 = arith.constant 0 : index
    %c0_235 = arith.constant 0 : index
    %342 = vector.load %arg4[%c6_232, %c1_233, %c0_234, %c0_235] : memref<8x3x2x32xf32, #tpu.memory_space<vmem>>, vector<1x1x2x32xf32>
    %343 = vector.shape_cast %342 : vector<1x1x2x32xf32> to vector<2x32xf32>
    %344 = vector.shape_cast %341 : vector<2x32xf32> to vector<1x1x2x32xf32>
    tpu.vector_store %arg4[%c6_232, %c1_233, %c0_234, %c0_235], %344 {strides = array<i32>} : memref<8x3x2x32xf32, #tpu.memory_space<vmem>>, vector<1x1x2x32xf32>,
    %c2_236 = arith.constant 2 : index
    %c0_237 = arith.constant 0 : index
    %c0_238 = arith.constant 0 : index
    %345 = vector.load %arg2[%c2_236, %c0_237, %c0_238] : memref<3x32x96xf32, #tpu.memory_space<vmem>>, vector<1x32x96xf32>
    %346 = vector.shape_cast %345 : vector<1x32x96xf32> to vector<32x96xf32>
    %cst_239 = arith.constant dense<0.000000e+00> : vector<2x96xf32>
    %347 = tpu.matmul %341, %346, %cst_239 {dimension_numbers = #tpu.dot_dimension_numbers<[1], [0], [0], [1], [0, 0, 1, 1], [], []>} : vector<2x32xf32>, vector<32x96xf32>, vector<2x96xf32> -> vector<2x96xf32>
    %c2_240 = arith.constant 2 : index
    %c0_241 = arith.constant 0 : index
    %c0_242 = arith.constant 0 : index
    %348 = vector.load %arg3[%c2_240, %c0_241, %c0_242] : memref<3x1x96xf32, #tpu.memory_space<vmem>>, vector<1x1x96xf32>
    %349 = vector.shape_cast %348 : vector<1x1x96xf32> to vector<1x96xf32>
    %350 = vector.broadcast %349 : vector<1x96xf32> to vector<2x96xf32>
    %351 = arith.addf %347, %350 : vector<2x96xf32>
    %352 = vector.extract_strided_slice %351 {offsets = [0, 0], sizes = [2, 32], strides = [1, 1]} : vector<2x96xf32> to vector<2x32xf32>
    %353 = vector.extract_strided_slice %351 {offsets = [0, 32], sizes = [2, 32], strides = [1, 1]} : vector<2x96xf32> to vector<2x32xf32>
    %354 = vector.extract_strided_slice %351 {offsets = [0, 64], sizes = [2, 32], strides = [1, 1]} : vector<2x96xf32> to vector<2x32xf32>
    %355 = arith.mulf %352, %353 : vector<2x32xf32>
    %356 = arith.mulf %341, %354 : vector<2x32xf32>
    %357 = arith.addf %355, %356 : vector<2x32xf32>
    %c6_243 = arith.constant 6 : index
    %c2_244 = arith.constant 2 : index
    %c0_245 = arith.constant 0 : index
    %c0_246 = arith.constant 0 : index
    %358 = vector.load %arg4[%c6_243, %c2_244, %c0_245, %c0_246] : memref<8x3x2x32xf32, #tpu.memory_space<vmem>>, vector<1x1x2x32xf32>
    %359 = vector.shape_cast %358 : vector<1x1x2x32xf32> to vector<2x32xf32>
    %360 = vector.shape_cast %357 : vector<2x32xf32> to vector<1x1x2x32xf32>
    tpu.vector_store %arg4[%c6_243, %c2_244, %c0_245, %c0_246], %360 {strides = array<i32>} : memref<8x3x2x32xf32, #tpu.memory_space<vmem>>, vector<1x1x2x32xf32>,
    %c7 = arith.constant 7 : index
    %c0_247 = arith.constant 0 : index
    %c0_248 = arith.constant 0 : index
    %361 = vector.load %arg1[%c7, %c0_247, %c0_248] : memref<8x2x96xf32, #tpu.memory_space<vmem>>, vector<1x2x96xf32>
    %362 = vector.shape_cast %361 : vector<1x2x96xf32> to vector<2x96xf32>
    %c0_249 = arith.constant 0 : index
    %c0_250 = arith.constant 0 : index
    %c0_251 = arith.constant 0 : index
    %363 = vector.load %arg2[%c0_249, %c0_250, %c0_251] : memref<3x32x96xf32, #tpu.memory_space<vmem>>, vector<1x32x96xf32>
    %364 = vector.shape_cast %363 : vector<1x32x96xf32> to vector<32x96xf32>
    %cst_252 = arith.constant dense<0.000000e+00> : vector<2x96xf32>
    %365 = tpu.matmul %357, %364, %cst_252 {dimension_numbers = #tpu.dot_dimension_numbers<[1], [0], [0], [1], [0, 0, 1, 1], [], []>} : vector<2x32xf32>, vector<32x96xf32>, vector<2x96xf32> -> vector<2x96xf32>
    %c0_253 = arith.constant 0 : index
    %c0_254 = arith.constant 0 : index
    %c0_255 = arith.constant 0 : index
    %366 = vector.load %arg3[%c0_253, %c0_254, %c0_255] : memref<3x1x96xf32, #tpu.memory_space<vmem>>, vector<1x1x96xf32>
    %367 = vector.shape_cast %366 : vector<1x1x96xf32> to vector<1x96xf32>
    %368 = vector.broadcast %367 : vector<1x96xf32> to vector<2x96xf32>
    %369 = arith.addf %365, %368 : vector<2x96xf32>
    %370 = arith.addf %369, %362 : vector<2x96xf32>
    %371 = vector.extract_strided_slice %370 {offsets = [0, 0], sizes = [2, 32], strides = [1, 1]} : vector<2x96xf32> to vector<2x32xf32>
    %372 = vector.extract_strided_slice %370 {offsets = [0, 32], sizes = [2, 32], strides = [1, 1]} : vector<2x96xf32> to vector<2x32xf32>
    %373 = vector.extract_strided_slice %370 {offsets = [0, 64], sizes = [2, 32], strides = [1, 1]} : vector<2x96xf32> to vector<2x32xf32>
    %374 = arith.mulf %371, %372 : vector<2x32xf32>
    %375 = arith.mulf %357, %373 : vector<2x32xf32>
    %376 = arith.addf %374, %375 : vector<2x32xf32>
    %c7_256 = arith.constant 7 : index
    %c0_257 = arith.constant 0 : index
    %c0_258 = arith.constant 0 : index
    %c0_259 = arith.constant 0 : index
    %377 = vector.load %arg4[%c7_256, %c0_257, %c0_258, %c0_259] : memref<8x3x2x32xf32, #tpu.memory_space<vmem>>, vector<1x1x2x32xf32>
    %378 = vector.shape_cast %377 : vector<1x1x2x32xf32> to vector<2x32xf32>
    %379 = vector.shape_cast %376 : vector<2x32xf32> to vector<1x1x2x32xf32>
    tpu.vector_store %arg4[%c7_256, %c0_257, %c0_258, %c0_259], %379 {strides = array<i32>} : memref<8x3x2x32xf32, #tpu.memory_space<vmem>>, vector<1x1x2x32xf32>,
    %c1_260 = arith.constant 1 : index
    %c0_261 = arith.constant 0 : index
    %c0_262 = arith.constant 0 : index
    %380 = vector.load %arg2[%c1_260, %c0_261, %c0_262] : memref<3x32x96xf32, #tpu.memory_space<vmem>>, vector<1x32x96xf32>
    %381 = vector.shape_cast %380 : vector<1x32x96xf32> to vector<32x96xf32>
    %cst_263 = arith.constant dense<0.000000e+00> : vector<2x96xf32>
    %382 = tpu.matmul %376, %381, %cst_263 {dimension_numbers = #tpu.dot_dimension_numbers<[1], [0], [0], [1], [0, 0, 1, 1], [], []>} : vector<2x32xf32>, vector<32x96xf32>, vector<2x96xf32> -> vector<2x96xf32>
    %c1_264 = arith.constant 1 : index
    %c0_265 = arith.constant 0 : index
    %c0_266 = arith.constant 0 : index
    %383 = vector.load %arg3[%c1_264, %c0_265, %c0_266] : memref<3x1x96xf32, #tpu.memory_space<vmem>>, vector<1x1x96xf32>
    %384 = vector.shape_cast %383 : vector<1x1x96xf32> to vector<1x96xf32>
    %385 = vector.broadcast %384 : vector<1x96xf32> to vector<2x96xf32>
    %386 = arith.addf %382, %385 : vector<2x96xf32>
    %387 = vector.extract_strided_slice %386 {offsets = [0, 0], sizes = [2, 32], strides = [1, 1]} : vector<2x96xf32> to vector<2x32xf32>
    %388 = vector.extract_strided_slice %386 {offsets = [0, 32], sizes = [2, 32], strides = [1, 1]} : vector<2x96xf32> to vector<2x32xf32>
    %389 = vector.extract_strided_slice %386 {offsets = [0, 64], sizes = [2, 32], strides = [1, 1]} : vector<2x96xf32> to vector<2x32xf32>
    %390 = arith.mulf %387, %388 : vector<2x32xf32>
    %391 = arith.mulf %376, %389 : vector<2x32xf32>
    %392 = arith.addf %390, %391 : vector<2x32xf32>
    %c7_267 = arith.constant 7 : index
    %c1_268 = arith.constant 1 : index
    %c0_269 = arith.constant 0 : index
    %c0_270 = arith.constant 0 : index
    %393 = vector.load %arg4[%c7_267, %c1_268, %c0_269, %c0_270] : memref<8x3x2x32xf32, #tpu.memory_space<vmem>>, vector<1x1x2x32xf32>
    %394 = vector.shape_cast %393 : vector<1x1x2x32xf32> to vector<2x32xf32>
    %395 = vector.shape_cast %392 : vector<2x32xf32> to vector<1x1x2x32xf32>
    tpu.vector_store %arg4[%c7_267, %c1_268, %c0_269, %c0_270], %395 {strides = array<i32>} : memref<8x3x2x32xf32, #tpu.memory_space<vmem>>, vector<1x1x2x32xf32>,
    %c2_271 = arith.constant 2 : index
    %c0_272 = arith.constant 0 : index
    %c0_273 = arith.constant 0 : index
    %396 = vector.load %arg2[%c2_271, %c0_272, %c0_273] : memref<3x32x96xf32, #tpu.memory_space<vmem>>, vector<1x32x96xf32>
    %397 = vector.shape_cast %396 : vector<1x32x96xf32> to vector<32x96xf32>
    %cst_274 = arith.constant dense<0.000000e+00> : vector<2x96xf32>
    %398 = tpu.matmul %392, %397, %cst_274 {dimension_numbers = #tpu.dot_dimension_numbers<[1], [0], [0], [1], [0, 0, 1, 1], [], []>} : vector<2x32xf32>, vector<32x96xf32>, vector<2x96xf32> -> vector<2x96xf32>
    %c2_275 = arith.constant 2 : index
    %c0_276 = arith.constant 0 : index
    %c0_277 = arith.constant 0 : index
    %399 = vector.load %arg3[%c2_275, %c0_276, %c0_277] : memref<3x1x96xf32, #tpu.memory_space<vmem>>, vector<1x1x96xf32>
    %400 = vector.shape_cast %399 : vector<1x1x96xf32> to vector<1x96xf32>
    %401 = vector.broadcast %400 : vector<1x96xf32> to vector<2x96xf32>
    %402 = arith.addf %398, %401 : vector<2x96xf32>
    %403 = vector.extract_strided_slice %402 {offsets = [0, 0], sizes = [2, 32], strides = [1, 1]} : vector<2x96xf32> to vector<2x32xf32>
    %404 = vector.extract_strided_slice %402 {offsets = [0, 32], sizes = [2, 32], strides = [1, 1]} : vector<2x96xf32> to vector<2x32xf32>
    %405 = vector.extract_strided_slice %402 {offsets = [0, 64], sizes = [2, 32], strides = [1, 1]} : vector<2x96xf32> to vector<2x32xf32>
    %406 = arith.mulf %403, %404 : vector<2x32xf32>
    %407 = arith.mulf %392, %405 : vector<2x32xf32>
    %408 = arith.addf %406, %407 : vector<2x32xf32>
    %c7_278 = arith.constant 7 : index
    %c2_279 = arith.constant 2 : index
    %c0_280 = arith.constant 0 : index
    %c0_281 = arith.constant 0 : index
    %409 = vector.load %arg4[%c7_278, %c2_279, %c0_280, %c0_281] : memref<8x3x2x32xf32, #tpu.memory_space<vmem>>, vector<1x1x2x32xf32>
    %410 = vector.shape_cast %409 : vector<1x1x2x32xf32> to vector<2x32xf32>
    %411 = vector.shape_cast %408 : vector<2x32xf32> to vector<1x1x2x32xf32>
    tpu.vector_store %arg4[%c7_278, %c2_279, %c0_280, %c0_281], %411 {strides = array<i32>} : memref<8x3x2x32xf32, #tpu.memory_space<vmem>>, vector<1x1x2x32xf32>,
    %c0_282 = arith.constant 0 : index
    %c0_283 = arith.constant 0 : index
    %412 = vector.load %arg5[%c0_282, %c0_283] : memref<2x32xf32, #tpu.memory_space<vmem>>, vector<2x32xf32>
    tpu.vector_store %arg5[%c0_282, %c0_283], %408 {strides = array<i32>} : memref<2x32xf32, #tpu.memory_space<vmem>>, vector<2x32xf32>,
    return
  }
  func.func @transform_0(%arg0: i32) -> (i32, i32, i32) {
    %c0_i32 = arith.constant 0 : i32
    %c0_i32_0 = arith.constant 0 : i32
    %c0_i32_1 = arith.constant 0 : i32
    return %arg0, %c0_i32, %c0_i32_0 : i32, i32, i32
  }
  func.func @transform_1(%arg0: i32) -> (i32, i32, i32) {
    %c0_i32 = arith.constant 0 : i32
    %c0_i32_0 = arith.constant 0 : i32
    %c0_i32_1 = arith.constant 0 : i32
    %c0_i32_2 = arith.constant 0 : i32
    return %c0_i32, %c0_i32_0, %c0_i32_1 : i32, i32, i32
  }
  func.func @transform_2(%arg0: i32) -> (i32, i32, i32) {
    %c0_i32 = arith.constant 0 : i32
    %c0_i32_0 = arith.constant 0 : i32
    %c0_i32_1 = arith.constant 0 : i32
    %c0_i32_2 = arith.constant 0 : i32
    return %c0_i32, %c0_i32_0, %c0_i32_1 : i32, i32, i32
  }
  func.func @transform_3(%arg0: i32) -> (i32, i32, i32, i32) {
    %c0_i32 = arith.constant 0 : i32
    %c0_i32_0 = arith.constant 0 : i32
    %c0_i32_1 = arith.constant 0 : i32
    %c0_i32_2 = arith.constant 0 : i32
    return %arg0, %c0_i32, %c0_i32_0, %c0_i32_1 : i32, i32, i32, i32
  }
}

</mosaic_0001>

<llo_original>
// kernel: tpu_custom_call.1
$region0: #{tpu_custom_call.1}
  #allocation0 [shape = 'u32[]', space=smem, size = 0x4, offset = 0x4, fixed_abs, tag = 'smem constant byte address 0x4 - core index']
  #allocation1 [shape = 'u32[72,128]{1,0:T(1,128)}', space=vmem, size = 0x9000, scoped, tag = 'internal scratch']
  #allocation2 [shape = 'f32[2,32]{1,0:T(2,128)}', space=vmem, size = 0x400, scoped, tag = 'scratch operand']
  %s0 = inlined_call_operand.hbm [shape: f32[8,2,96], index: 0, kind: input, shape index: {}]
  %s1 = inlined_call_operand.hbm [shape: f32[3,32,96], index: 1, kind: input, shape index: {}]
  %s2 = inlined_call_operand.hbm [shape: f32[3,1,96], index: 2, kind: input, shape index: {}]
  %s3 = inlined_call_operand.hbm [shape: f32[8,3,2,32], index: 3, kind: output, shape index: {}]
  %s4 = sld [smem:[#allocation0]]
  $region38: #{tpu_custom_call.1} parent=0
    _
  %s6 = ssub.s32 1, %s4
  %s7 = scalar_select 0, %s6, %s4
  $region1: #{tpu_custom_call.1} parent=0
    #allocation3 [shape = 'u8[8192]{0}', space=vmem, size = 0x2000, scoped, tag = 'input window, operand 0, single buffered']
    #allocation4 [shape = 's32[1]{0}', space=sflag, size = 0x4, scoped, tag = 'scoped memory for tpu_custom_call.1']
    #allocation5 [shape = 's32[1]{0}', space=sflag, size = 0x4, scoped, tag = 'scoped memory for tpu_custom_call.1']
    #allocation6 [shape = 'u8[49152]{0}', space=vmem, size = 0xc000, scoped, tag = 'input window, operand 1, single buffered']
    #allocation7 [shape = 's32[1]{0}', space=sflag, size = 0x4, scoped, tag = 'scoped memory for tpu_custom_call.1']
    #allocation8 [shape = 'u8[1536]{0}', space=vmem, size = 0x800, scoped, tag = 'input window, operand 2, single buffered']
    #allocation9 [shape = 'u8[24576]{0}', space=vmem, size = 0x6000, scoped, tag = 'output window, operand 0, single buffered']
    %8 = vsyncpa [#allocation4], 0
    %9 = vsyncpa [#allocation7], 0
    %10 = vsyncpa [#allocation5], 0
    // Predicated region
    $region2: #{tpu_custom_call.1} parent=1 // pred_check
      _
    $region3: #{tpu_custom_call.1} parent=1 // pred_check_branch
      %12 = sbr.rel (0) target = $region5
    $region4: #{tpu_custom_call.1} parent=1 // pred_region
      %14 = vsyncadd [#allocation4], 0
      %s15 = sshll.u32 %s0, 4
      %s16 = int_to_ptr.hbm [resolvable:$true] %s15
      %s17 = sshll.u32 [#allocation3], 4
      %s18 = int_to_ptr.vmem [resolvable:$true] %s17
      %23 = dma.hbm_to_vmem [thread:$0]  %s16, 256, %s18, [#allocation4], 32, 32, 2
    $region5: #{tpu_custom_call.1} parent=1 // pred_fallthru
      _
    // Predicated region
    $region6: #{tpu_custom_call.1} parent=1 // pred_check
      _
    $region7: #{tpu_custom_call.1} parent=1 // pred_check_branch
      %25 = sbr.rel (0) target = $region9
    $region8: #{tpu_custom_call.1} parent=1 // pred_region
      %27 = vsyncadd [#allocation7], 0
      %s28 = sshll.u32 %s1, 4
      %s29 = int_to_ptr.hbm [resolvable:$true] %s28
      %s30 = sshll.u32 [#allocation6], 4
      %s31 = int_to_ptr.vmem [resolvable:$true] %s30
      %36 = dma.hbm_to_vmem [thread:$0]  %s29, 1536, %s31, [#allocation7], 128, 128, 8
    $region9: #{tpu_custom_call.1} parent=1 // pred_fallthru
      _
    // Predicated region
    $region10: #{tpu_custom_call.1} parent=1 // pred_check
      _
    $region11: #{tpu_custom_call.1} parent=1 // pred_check_branch
      %38 = sbr.rel (0) target = $region13
    $region12: #{tpu_custom_call.1} parent=1 // pred_region
      %40 = vsyncadd [#allocation7], 0
      %s41 = sshll.u32 %s2, 4
      %s42 = int_to_ptr.hbm [resolvable:$true] %s41
      %s43 = sshll.u32 [#allocation8], 4
      %s44 = int_to_ptr.vmem [resolvable:$true] %s43
      %49 = dma.hbm_to_vmem [thread:$0]  %s42, 48, %s44, [#allocation7], 16, 16, 1
    $region13: #{tpu_custom_call.1} parent=1 // pred_fallthru
      _
    // Predicated region
    $region14: #{tpu_custom_call.1} parent=1 // pred_check
      _
    $region15: #{tpu_custom_call.1} parent=1 // pred_check_branch
      %51 = sbr.rel (0) target = $region17
    $region16: #{tpu_custom_call.1} parent=1 // pred_region
      %53 = dma.done [#allocation4], 256
    $region17: #{tpu_custom_call.1} parent=1 // pred_fallthru
      _
    // Predicated region
    $region18: #{tpu_custom_call.1} parent=1 // pred_check
      _
    $region19: #{tpu_custom_call.1} parent=1 // pred_check_branch
      %55 = sbr.rel (0) target = $region21
    $region20: #{tpu_custom_call.1} parent=1 // pred_region
      %57 = dma.done [#allocation7], 1536
    $region21: #{tpu_custom_call.1} parent=1 // pred_fallthru
      _
    // Predicated region
    $region22: #{tpu_custom_call.1} parent=1 // pred_check
      _
    $region23: #{tpu_custom_call.1} parent=1 // pred_check_branch
      %59 = sbr.rel (0) target = $region25
    $region24: #{tpu_custom_call.1} parent=1 // pred_region
      %61 = dma.done [#allocation7], 48
    $region25: #{tpu_custom_call.1} parent=1 // pred_fallthru
      _
    %p62 = scmp.eq.s32.totalorder 0, 0
    // Predicated region
    $region26: #{tpu_custom_call.1} parent=1 // pred_check
      %p63 = pneg %p62
    $region27: #{tpu_custom_call.1} parent=1 // pred_check_branch
      %65 = sbr.rel (%p63) target = $region29
    $region28: #{tpu_custom_call.1} parent=1 // pred_region
      %vm66 = vcmask 254976
      %67 = vst.msk [vmem:[#allocation2] sm:$0x3] %vm66, 0.0
    $region29: #{tpu_custom_call.1} parent=1 // pred_fallthru
      _
    %v68 = vld [vmem:[#allocation2] sm:$0x3]
    %v69 = vld [vmem:[#allocation3] sm:$0x3]
    %v70 = vld [vmem:[#allocation6] sm:$0xff]
    %v71 = vld [vmem:[#allocation6 + $0x8] sm:$0xff]
    %v72 = vld [vmem:[#allocation6 + $0x10] sm:$0xff]
    %v73 = vld [vmem:[#allocation6 + $0x18] sm:$0xff]
    %v74 = vld [vmem:[#allocation8] sm:$0x1]
    %v76 = vperm.slane %v74, 0
    %vm78 = vcmask 261120
    %v80 = vsel %vm78, %v68, 0
    %82 = vmatpush.msra.mxu0 0.0
    %83 = vmatpush.msra.mxu0 0.0
    %84 = vmatpush.msra.mxu0 0.0
    %85 = vmatpush.msra.mxu0 0.0
    %86 = vmatpush.msra.mxu0 0.0
    %87 = vmatpush.msra.mxu0 0.0
    %88 = vmatpush.msra.mxu0 0.0
    %89 = vmatpush.msra.mxu0 0.0
    %90 = vmatpush.msra.mxu0 0.0
    %91 = vmatpush.msra.mxu0 0.0
    %92 = vmatpush.msra.mxu0 0.0
    %93 = vmatpush.msra.mxu0 0.0
    %94 = vmatpush.msra.mxu0 %v73
    %95 = vmatpush.msra.mxu0 %v72
    %96 = vmatpush.msra.mxu0 %v71
    %97 = vmatpush.msra.mxu0 %v70
    %98 = vmatmul.f32.gmra.mxu0 %v80
    %v99 = vpop.f32.mrf.mxu0
    %v100 = vadd.f32 %v76, %v99
    %101 = vdwg.mxu0
    %v102 = vadd.f32 %v100, %v69
    %104 = vrot.lane.b32.xlu0 %v102, 96
    %v105 = vpop.permute.xlu0 %104
    %v107 = vmul.f32 %v102, %v105
    %108 = vrot.lane.b32.xlu0 %v102, 64
    %v109 = vpop.permute.xlu0 %108
    %v111 = vmul.f32 %v68, %v109
    %v112 = vadd.f32 %v107, %v111
    %vm113 = vcmask 254976
    %114 = vst.msk [vmem:[#allocation9] sm:$0x3] %vm113, %v112
    %s115 = scalar_lea.vmem [#allocation6], 32
    %v116 = vld [vmem:[%s115] sm:$0xff]
    %v117 = vld [vmem:[%s115 + $0x8] sm:$0xff]
    %v118 = vld [vmem:[%s115 + $0x10] sm:$0xff]
    %v119 = vld [vmem:[%s115 + $0x18] sm:$0xff]
    %s120 = scalar_lea.vmem [#allocation8], 1
    %v121 = vld [vmem:[%s120] sm:$0x1]
    %v123 = vperm.slane %v121, 0
    %v126 = vsel %vm78, %v112, 0
    %128 = vmatpush.msra.mxu0 0.0
    %129 = vmatpush.msra.mxu0 0.0
    %130 = vmatpush.msra.mxu0 0.0
    %131 = vmatpush.msra.mxu0 0.0
    %132 = vmatpush.msra.mxu0 0.0
    %133 = vmatpush.msra.mxu0 0.0
    %134 = vmatpush.msra.mxu0 0.0
    %135 = vmatpush.msra.mxu0 0.0
    %136 = vmatpush.msra.mxu0 0.0
    %137 = vmatpush.msra.mxu0 0.0
    %138 = vmatpush.msra.mxu0 0.0
    %139 = vmatpush.msra.mxu0 0.0
    %140 = vmatpush.msra.mxu0 %v119
    %141 = vmatpush.msra.mxu0 %v118
    %142 = vmatpush.msra.mxu0 %v117
    %143 = vmatpush.msra.mxu0 %v116
    %144 = vmatmul.f32.gmra.mxu0 %v126
    %v145 = vpop.f32.mrf.mxu0
    %v146 = vadd.f32 %v123, %v145
    %147 = vdwg.mxu0
    %149 = vrot.lane.b32.xlu0 %v146, 96
    %v150 = vpop.permute.xlu0 %149
    %v152 = vmul.f32 %v146, %v150
    %153 = vrot.lane.b32.xlu0 %v146, 64
    %v154 = vpop.permute.xlu0 %153
    %v156 = vmul.f32 %v112, %v154
    %v157 = vadd.f32 %v152, %v156
    %s158 = scalar_lea.vmem [#allocation9], 2
    %159 = vst.msk [vmem:[%s158] sm:$0x3] %vm113, %v157
    %s160 = scalar_lea.vmem [#allocation6], 64
    %v161 = vld [vmem:[%s160] sm:$0xff]
    %v162 = vld [vmem:[%s160 + $0x8] sm:$0xff]
    %v163 = vld [vmem:[%s160 + $0x10] sm:$0xff]
    %v164 = vld [vmem:[%s160 + $0x18] sm:$0xff]
    %s165 = scalar_lea.vmem [#allocation8], 2
    %v166 = vld [vmem:[%s165] sm:$0x1]
    %v168 = vperm.slane %v166, 0
    %v171 = vsel %vm78, %v157, 0
    %173 = vmatpush.msra.mxu0 0.0
    %174 = vmatpush.msra.mxu0 0.0
    %175 = vmatpush.msra.mxu0 0.0
    %176 = vmatpush.msra.mxu0 0.0
    %177 = vmatpush.msra.mxu0 0.0
    %178 = vmatpush.msra.mxu0 0.0
    %179 = vmatpush.msra.mxu0 0.0
    %180 = vmatpush.msra.mxu0 0.0
    %181 = vmatpush.msra.mxu0 0.0
    %182 = vmatpush.msra.mxu0 0.0
    %183 = vmatpush.msra.mxu0 0.0
    %184 = vmatpush.msra.mxu0 0.0
    %185 = vmatpush.msra.mxu0 %v164
    %186 = vmatpush.msra.mxu0 %v163
    %187 = vmatpush.msra.mxu0 %v162
    %188 = vmatpush.msra.mxu0 %v161
    %189 = vmatmul.f32.gmra.mxu0 %v171
    %v190 = vpop.f32.mrf.mxu0
    %v191 = vadd.f32 %v168, %v190
    %192 = vdwg.mxu0
    %194 = vrot.lane.b32.xlu0 %v191, 96
    %v195 = vpop.permute.xlu0 %194
    %v197 = vmul.f32 %v191, %v195
    %198 = vrot.lane.b32.xlu0 %v191, 64
    %v199 = vpop.permute.xlu0 %198
    %v201 = vmul.f32 %v157, %v199
    %v202 = vadd.f32 %v197, %v201
    %s203 = scalar_lea.vmem [#allocation9], 4
    %204 = vst.msk [vmem:[%s203] sm:$0x3] %vm113, %v202
    %s205 = scalar_lea.vmem [#allocation3], 2
    %v206 = vld [vmem:[%s205] sm:$0x3]
    %v207 = vld [vmem:[#allocation6] sm:$0xff]
    %v208 = vld [vmem:[#allocation6 + $0x8] sm:$0xff]
    %v209 = vld [vmem:[#allocation6 + $0x10] sm:$0xff]
    %v210 = vld [vmem:[#allocation6 + $0x18] sm:$0xff]
    %v211 = vld [vmem:[#allocation8] sm:$0x1]
    %v213 = vperm.slane %v211, 0
    %v216 = vsel %vm78, %v202, 0
    %218 = vmatpush.msra.mxu0 0.0
    %219 = vmatpush.msra.mxu0 0.0
    %220 = vmatpush.msra.mxu0 0.0
    %221 = vmatpush.msra.mxu0 0.0
    %222 = vmatpush.msra.mxu0 0.0
    %223 = vmatpush.msra.mxu0 0.0
    %224 = vmatpush.msra.mxu0 0.0
    %225 = vmatpush.msra.mxu0 0.0
    %226 = vmatpush.msra.mxu0 0.0
    %227 = vmatpush.msra.mxu0 0.0
    %228 = vmatpush.msra.mxu0 0.0
    %229 = vmatpush.msra.mxu0 0.0
    %230 = vmatpush.msra.mxu0 %v210
    %231 = vmatpush.msra.mxu0 %v209
    %232 = vmatpush.msra.mxu0 %v208
    %233 = vmatpush.msra.mxu0 %v207
    %234 = vmatmul.f32.gmra.mxu0 %v216
    %v235 = vpop.f32.mrf.mxu0
    %v236 = vadd.f32 %v213, %v235
    %237 = vdwg.mxu0
    %v238 = vadd.f32 %v236, %v206
    %240 = vrot.lane.b32.xlu0 %v238, 96
    %v241 = vpop.permute.xlu0 %240
    %v243 = vmul.f32 %v238, %v241
    %244 = vrot.lane.b32.xlu0 %v238, 64
    %v245 = vpop.permute.xlu0 %244
    %v247 = vmul.f32 %v202, %v245
    %v248 = vadd.f32 %v243, %v247
    %s249 = scalar_lea.vmem [#allocation9], 6
    %250 = vst.msk [vmem:[%s249] sm:$0x3] %vm113, %v248
    %v251 = vld [vmem:[%s115] sm:$0xff]
    %v252 = vld [vmem:[%s115 + $0x8] sm:$0xff]
    %v253 = vld [vmem:[%s115 + $0x10] sm:$0xff]
    %v254 = vld [vmem:[%s115 + $0x18] sm:$0xff]
    %v255 = vld [vmem:[%s120] sm:$0x1]
    %v257 = vperm.slane %v255, 0
    %v260 = vsel %vm78, %v248, 0
    %262 = vmatpush.msra.mxu0 0.0
    %263 = vmatpush.msra.mxu0 0.0
    %264 = vmatpush.msra.mxu0 0.0
    %265 = vmatpush.msra.mxu0 0.0
    %266 = vmatpush.msra.mxu0 0.0
    %267 = vmatpush.msra.mxu0 0.0
    %268 = vmatpush.msra.mxu0 0.0
    %269 = vmatpush.msra.mxu0 0.0
    %270 = vmatpush.msra.mxu0 0.0
    %271 = vmatpush.msra.mxu0 0.0
    %272 = vmatpush.msra.mxu0 0.0
    %273 = vmatpush.msra.mxu0 0.0
    %274 = vmatpush.msra.mxu0 %v254
    %275 = vmatpush.msra.mxu0 %v253
    %276 = vmatpush.msra.mxu0 %v252
    %277 = vmatpush.msra.mxu0 %v251
    %278 = vmatmul.f32.gmra.mxu0 %v260
    %v279 = vpop.f32.mrf.mxu0
    %v280 = vadd.f32 %v257, %v279
    %281 = vdwg.mxu0
    %283 = vrot.lane.b32.xlu0 %v280, 96
    %v284 = vpop.permute.xlu0 %283
    %v286 = vmul.f32 %v280, %v284
    %287 = vrot.lane.b32.xlu0 %v280, 64
    %v288 = vpop.permute.xlu0 %287
    %v290 = vmul.f32 %v248, %v288
    %v291 = vadd.f32 %v286, %v290
    %s292 = scalar_lea.vmem [#allocation9], 8
    %293 = vst.msk [vmem:[%s292] sm:$0x3] %vm113, %v291
    %v294 = vld [vmem:[%s160] sm:$0xff]
    %v295 = vld [vmem:[%s160 + $0x8] sm:$0xff]
    %v296 = vld [vmem:[%s160 + $0x10] sm:$0xff]
    %v297 = vld [vmem:[%s160 + $0x18] sm:$0xff]
    %v298 = vld [vmem:[%s165] sm:$0x1]
    %v300 = vperm.slane %v298, 0
    %v303 = vsel %vm78, %v291, 0
    %305 = vmatpush.msra.mxu0 0.0
    %306 = vmatpush.msra.mxu0 0.0
    %307 = vmatpush.msra.mxu0 0.0
    %308 = vmatpush.msra.mxu0 0.0
    %309 = vmatpush.msra.mxu0 0.0
    %310 = vmatpush.msra.mxu0 0.0
    %311 = vmatpush.msra.mxu0 0.0
    %312 = vmatpush.msra.mxu0 0.0
    %313 = vmatpush.msra.mxu0 0.0
    %314 = vmatpush.msra.mxu0 0.0
    %315 = vmatpush.msra.mxu0 0.0
    %316 = vmatpush.msra.mxu0 0.0
    %317 = vmatpush.msra.mxu0 %v297
    %318 = vmatpush.msra.mxu0 %v296
    %319 = vmatpush.msra.mxu0 %v295
    %320 = vmatpush.msra.mxu0 %v294
    %321 = vmatmul.f32.gmra.mxu0 %v303
    %v322 = vpop.f32.mrf.mxu0
    %v323 = vadd.f32 %v300, %v322
    %324 = vdwg.mxu0
    %326 = vrot.lane.b32.xlu0 %v323, 96
    %v327 = vpop.permute.xlu0 %326
    %v329 = vmul.f32 %v323, %v327
    %330 = vrot.lane.b32.xlu0 %v323, 64
    %v331 = vpop.permute.xlu0 %330
    %v333 = vmul.f32 %v291, %v331
    %v334 = vadd.f32 %v329, %v333
    %s335 = scalar_lea.vmem [#allocation9], 10
    %336 = vst.msk [vmem:[%s335] sm:$0x3] %vm113, %v334
    %s337 = scalar_lea.vmem [#allocation3], 4
    %v338 = vld [vmem:[%s337] sm:$0x3]
    %v339 = vld [vmem:[#allocation6] sm:$0xff]
    %v340 = vld [vmem:[#allocation6 + $0x8] sm:$0xff]
    %v341 = vld [vmem:[#allocation6 + $0x10] sm:$0xff]
    %v342 = vld [vmem:[#allocation6 + $0x18] sm:$0xff]
    %v343 = vld [vmem:[#allocation8] sm:$0x1]
    %v345 = vperm.slane %v343, 0
    %v348 = vsel %vm78, %v334, 0
    %350 = vmatpush.msra.mxu0 0.0
    %351 = vmatpush.msra.mxu0 0.0
    %352 = vmatpush.msra.mxu0 0.0
    %353 = vmatpush.msra.mxu0 0.0
    %354 = vmatpush.msra.mxu0 0.0
    %355 = vmatpush.msra.mxu0 0.0
    %356 = vmatpush.msra.mxu0 0.0
    %357 = vmatpush.msra.mxu0 0.0
    %358 = vmatpush.msra.mxu0 0.0
    %359 = vmatpush.msra.mxu0 0.0
    %360 = vmatpush.msra.mxu0 0.0
    %361 = vmatpush.msra.mxu0 0.0
    %362 = vmatpush.msra.mxu0 %v342
    %363 = vmatpush.msra.mxu0 %v341
    %364 = vmatpush.msra.mxu0 %v340
    %365 = vmatpush.msra.mxu0 %v339
    %366 = vmatmul.f32.gmra.mxu0 %v348
    %v367 = vpop.f32.mrf.mxu0
    %v368 = vadd.f32 %v345, %v367
    %369 = vdwg.mxu0
    %v370 = vadd.f32 %v368, %v338
    %372 = vrot.lane.b32.xlu0 %v370, 96
    %v373 = vpop.permute.xlu0 %372
    %v375 = vmul.f32 %v370, %v373
    %376 = vrot.lane.b32.xlu0 %v370, 64
    %v377 = vpop.permute.xlu0 %376
    %v379 = vmul.f32 %v334, %v377
    %v380 = vadd.f32 %v375, %v379
    %s381 = scalar_lea.vmem [#allocation9], 12
    %382 = vst.msk [vmem:[%s381] sm:$0x3] %vm113, %v380
    %v383 = vld [vmem:[%s115] sm:$0xff]
    %v384 = vld [vmem:[%s115 + $0x8] sm:$0xff]
    %v385 = vld [vmem:[%s115 + $0x10] sm:$0xff]
    %v386 = vld [vmem:[%s115 + $0x18] sm:$0xff]
    %v387 = vld [vmem:[%s120] sm:$0x1]
    %v389 = vperm.slane %v387, 0
    %v392 = vsel %vm78, %v380, 0
    %394 = vmatpush.msra.mxu0 0.0
    %395 = vmatpush.msra.mxu0 0.0
    %396 = vmatpush.msra.mxu0 0.0
    %397 = vmatpush.msra.mxu0 0.0
    %398 = vmatpush.msra.mxu0 0.0
    %399 = vmatpush.msra.mxu0 0.0
    %400 = vmatpush.msra.mxu0 0.0
    %401 = vmatpush.msra.mxu0 0.0
    %402 = vmatpush.msra.mxu0 0.0
    %403 = vmatpush.msra.mxu0 0.0
    %404 = vmatpush.msra.mxu0 0.0
    %405 = vmatpush.msra.mxu0 0.0
    %406 = vmatpush.msra.mxu0 %v386
    %407 = vmatpush.msra.mxu0 %v385
    %408 = vmatpush.msra.mxu0 %v384
    %409 = vmatpush.msra.mxu0 %v383
    %410 = vmatmul.f32.gmra.mxu0 %v392
    %v411 = vpop.f32.mrf.mxu0
    %v412 = vadd.f32 %v389, %v411
    %413 = vdwg.mxu0
    %415 = vrot.lane.b32.xlu0 %v412, 96
    %v416 = vpop.permute.xlu0 %415
    %v418 = vmul.f32 %v412, %v416
    %419 = vrot.lane.b32.xlu0 %v412, 64
    %v420 = vpop.permute.xlu0 %419
    %v422 = vmul.f32 %v380, %v420
    %v423 = vadd.f32 %v418, %v422
    %s424 = scalar_lea.vmem [#allocation9], 14
    %425 = vst.msk [vmem:[%s424] sm:$0x3] %vm113, %v423
    %v426 = vld [vmem:[%s160] sm:$0xff]
    %v427 = vld [vmem:[%s160 + $0x8] sm:$0xff]
    %v428 = vld [vmem:[%s160 + $0x10] sm:$0xff]
    %v429 = vld [vmem:[%s160 + $0x18] sm:$0xff]
    %v430 = vld [vmem:[%s165] sm:$0x1]
    %v432 = vperm.slane %v430, 0
    %v435 = vsel %vm78, %v423, 0
    %437 = vmatpush.msra.mxu0 0.0
    %438 = vmatpush.msra.mxu0 0.0
    %439 = vmatpush.msra.mxu0 0.0
    %440 = vmatpush.msra.mxu0 0.0
    %441 = vmatpush.msra.mxu0 0.0
    %442 = vmatpush.msra.mxu0 0.0
    %443 = vmatpush.msra.mxu0 0.0
    %444 = vmatpush.msra.mxu0 0.0
    %445 = vmatpush.msra.mxu0 0.0
    %446 = vmatpush.msra.mxu0 0.0
    %447 = vmatpush.msra.mxu0 0.0
    %448 = vmatpush.msra.mxu0 0.0
    %449 = vmatpush.msra.mxu0 %v429
    %450 = vmatpush.msra.mxu0 %v428
    %451 = vmatpush.msra.mxu0 %v427
    %452 = vmatpush.msra.mxu0 %v426
    %453 = vmatmul.f32.gmra.mxu0 %v435
    %v454 = vpop.f32.mrf.mxu0
    %v455 = vadd.f32 %v432, %v454
    %456 = vdwg.mxu0
    %458 = vrot.lane.b32.xlu0 %v455, 96
    %v459 = vpop.permute.xlu0 %458
    %v461 = vmul.f32 %v455, %v459
    %462 = vrot.lane.b32.xlu0 %v455, 64
    %v463 = vpop.permute.xlu0 %462
    %v465 = vmul.f32 %v423, %v463
    %v466 = vadd.f32 %v461, %v465
    %s467 = scalar_lea.vmem [#allocation9], 16
    %468 = vst.msk [vmem:[%s467] sm:$0x3] %vm113, %v466
    %s469 = scalar_lea.vmem [#allocation3], 6
    %v470 = vld [vmem:[%s469] sm:$0x3]
    %v471 = vld [vmem:[#allocation6] sm:$0xff]
    %v472 = vld [vmem:[#allocation6 + $0x8] sm:$0xff]
    %v473 = vld [vmem:[#allocation6 + $0x10] sm:$0xff]
    %v474 = vld [vmem:[#allocation6 + $0x18] sm:$0xff]
    %v475 = vld [vmem:[#allocation8] sm:$0x1]
    %v477 = vperm.slane %v475, 0
    %v480 = vsel %vm78, %v466, 0
    %482 = vmatpush.msra.mxu0 0.0
    %483 = vmatpush.msra.mxu0 0.0
    %484 = vmatpush.msra.mxu0 0.0
    %485 = vmatpush.msra.mxu0 0.0
    %486 = vmatpush.msra.mxu0 0.0
    %487 = vmatpush.msra.mxu0 0.0
    %488 = vmatpush.msra.mxu0 0.0
    %489 = vmatpush.msra.mxu0 0.0
    %490 = vmatpush.msra.mxu0 0.0
    %491 = vmatpush.msra.mxu0 0.0
    %492 = vmatpush.msra.mxu0 0.0
    %493 = vmatpush.msra.mxu0 0.0
    %494 = vmatpush.msra.mxu0 %v474
    %495 = vmatpush.msra.mxu0 %v473
    %496 = vmatpush.msra.mxu0 %v472
    %497 = vmatpush.msra.mxu0 %v471
    %498 = vmatmul.f32.gmra.mxu0 %v480
    %v499 = vpop.f32.mrf.mxu0
    %v500 = vadd.f32 %v477, %v499
    %501 = vdwg.mxu0
    %v502 = vadd.f32 %v500, %v470
    %504 = vrot.lane.b32.xlu0 %v502, 96
    %v505 = vpop.permute.xlu0 %504
    %v507 = vmul.f32 %v502, %v505
    %508 = vrot.lane.b32.xlu0 %v502, 64
    %v509 = vpop.permute.xlu0 %508
    %v511 = vmul.f32 %v466, %v509
    %v512 = vadd.f32 %v507, %v511
    %s513 = scalar_lea.vmem [#allocation9], 18
    %514 = vst.msk [vmem:[%s513] sm:$0x3] %vm113, %v512
    %v515 = vld [vmem:[%s115] sm:$0xff]
    %v516 = vld [vmem:[%s115 + $0x8] sm:$0xff]
    %v517 = vld [vmem:[%s115 + $0x10] sm:$0xff]
    %v518 = vld [vmem:[%s115 + $0x18] sm:$0xff]
    %v519 = vld [vmem:[%s120] sm:$0x1]
    %v521 = vperm.slane %v519, 0
    %v524 = vsel %vm78, %v512, 0
    %526 = vmatpush.msra.mxu0 0.0
    %527 = vmatpush.msra.mxu0 0.0
    %528 = vmatpush.msra.mxu0 0.0
    %529 = vmatpush.msra.mxu0 0.0
    %530 = vmatpush.msra.mxu0 0.0
    %531 = vmatpush.msra.mxu0 0.0
    %532 = vmatpush.msra.mxu0 0.0
    %533 = vmatpush.msra.mxu0 0.0
    %534 = vmatpush.msra.mxu0 0.0
    %535 = vmatpush.msra.mxu0 0.0
    %536 = vmatpush.msra.mxu0 0.0
    %537 = vmatpush.msra.mxu0 0.0
    %538 = vmatpush.msra.mxu0 %v518
    %539 = vmatpush.msra.mxu0 %v517
    %540 = vmatpush.msra.mxu0 %v516
    %541 = vmatpush.msra.mxu0 %v515
    %542 = vmatmul.f32.gmra.mxu0 %v524
    %v543 = vpop.f32.mrf.mxu0
    %v544 = vadd.f32 %v521, %v543
    %545 = vdwg.mxu0
    %547 = vrot.lane.b32.xlu0 %v544, 96
    %v548 = vpop.permute.xlu0 %547
    %v550 = vmul.f32 %v544, %v548
    %551 = vrot.lane.b32.xlu0 %v544, 64
    %v552 = vpop.permute.xlu0 %551
    %v554 = vmul.f32 %v512, %v552
    %v555 = vadd.f32 %v550, %v554
    %s556 = scalar_lea.vmem [#allocation9], 20
    %557 = vst.msk [vmem:[%s556] sm:$0x3] %vm113, %v555
    %v558 = vld [vmem:[%s160] sm:$0xff]
    %v559 = vld [vmem:[%s160 + $0x8] sm:$0xff]
    %v560 = vld [vmem:[%s160 + $0x10] sm:$0xff]
    %v561 = vld [vmem:[%s160 + $0x18] sm:$0xff]
    %v562 = vld [vmem:[%s165] sm:$0x1]
    %v564 = vperm.slane %v562, 0
    %v567 = vsel %vm78, %v555, 0
    %569 = vmatpush.msra.mxu0 0.0
    %570 = vmatpush.msra.mxu0 0.0
    %571 = vmatpush.msra.mxu0 0.0
    %572 = vmatpush.msra.mxu0 0.0
    %573 = vmatpush.msra.mxu0 0.0
    %574 = vmatpush.msra.mxu0 0.0
    %575 = vmatpush.msra.mxu0 0.0
    %576 = vmatpush.msra.mxu0 0.0
    %577 = vmatpush.msra.mxu0 0.0
    %578 = vmatpush.msra.mxu0 0.0
    %579 = vmatpush.msra.mxu0 0.0
    %580 = vmatpush.msra.mxu0 0.0
    %581 = vmatpush.msra.mxu0 %v561
    %582 = vmatpush.msra.mxu0 %v560
    %583 = vmatpush.msra.mxu0 %v559
    %584 = vmatpush.msra.mxu0 %v558
    %585 = vmatmul.f32.gmra.mxu0 %v567
    %v586 = vpop.f32.mrf.mxu0
    %v587 = vadd.f32 %v564, %v586
    %588 = vdwg.mxu0
    %590 = vrot.lane.b32.xlu0 %v587, 96
    %v591 = vpop.permute.xlu0 %590
    %v593 = vmul.f32 %v587, %v591
    %594 = vrot.lane.b32.xlu0 %v587, 64
    %v595 = vpop.permute.xlu0 %594
    %v597 = vmul.f32 %v555, %v595
    %v598 = vadd.f32 %v593, %v597
    %s599 = scalar_lea.vmem [#allocation9], 22
    %600 = vst.msk [vmem:[%s599] sm:$0x3] %vm113, %v598
    %s601 = scalar_lea.vmem [#allocation3], 8
    %v602 = vld [vmem:[%s601] sm:$0x3]
    %v603 = vld [vmem:[#allocation6] sm:$0xff]
    %v604 = vld [vmem:[#allocation6 + $0x8] sm:$0xff]
    %v605 = vld [vmem:[#allocation6 + $0x10] sm:$0xff]
    %v606 = vld [vmem:[#allocation6 + $0x18] sm:$0xff]
    %v607 = vld [vmem:[#allocation8] sm:$0x1]
    %v609 = vperm.slane %v607, 0
    %v612 = vsel %vm78, %v598, 0
    %614 = vmatpush.msra.mxu0 0.0
    %615 = vmatpush.msra.mxu0 0.0
    %616 = vmatpush.msra.mxu0 0.0
    %617 = vmatpush.msra.mxu0 0.0
    %618 = vmatpush.msra.mxu0 0.0
    %619 = vmatpush.msra.mxu0 0.0
    %620 = vmatpush.msra.mxu0 0.0
    %621 = vmatpush.msra.mxu0 0.0
    %622 = vmatpush.msra.mxu0 0.0
    %623 = vmatpush.msra.mxu0 0.0
    %624 = vmatpush.msra.mxu0 0.0
    %625 = vmatpush.msra.mxu0 0.0
    %626 = vmatpush.msra.mxu0 %v606
    %627 = vmatpush.msra.mxu0 %v605
    %628 = vmatpush.msra.mxu0 %v604
    %629 = vmatpush.msra.mxu0 %v603
    %630 = vmatmul.f32.gmra.mxu0 %v612
    %v631 = vpop.f32.mrf.mxu0
    %v632 = vadd.f32 %v609, %v631
    %633 = vdwg.mxu0
    %v634 = vadd.f32 %v632, %v602
    %636 = vrot.lane.b32.xlu0 %v634, 96
    %v637 = vpop.permute.xlu0 %636
    %v639 = vmul.f32 %v634, %v637
    %640 = vrot.lane.b32.xlu0 %v634, 64
    %v641 = vpop.permute.xlu0 %640
    %v643 = vmul.f32 %v598, %v641
    %v644 = vadd.f32 %v639, %v643
    %s645 = scalar_lea.vmem [#allocation9], 24
    %646 = vst.msk [vmem:[%s645] sm:$0x3] %vm113, %v644
    %v647 = vld [vmem:[%s115] sm:$0xff]
    %v648 = vld [vmem:[%s115 + $0x8] sm:$0xff]
    %v649 = vld [vmem:[%s115 + $0x10] sm:$0xff]
    %v650 = vld [vmem:[%s115 + $0x18] sm:$0xff]
    %v651 = vld [vmem:[%s120] sm:$0x1]
    %v653 = vperm.slane %v651, 0
    %v656 = vsel %vm78, %v644, 0
    %658 = vmatpush.msra.mxu0 0.0
    %659 = vmatpush.msra.mxu0 0.0
    %660 = vmatpush.msra.mxu0 0.0
    %661 = vmatpush.msra.mxu0 0.0
    %662 = vmatpush.msra.mxu0 0.0
    %663 = vmatpush.msra.mxu0 0.0
    %664 = vmatpush.msra.mxu0 0.0
    %665 = vmatpush.msra.mxu0 0.0
    %666 = vmatpush.msra.mxu0 0.0
    %667 = vmatpush.msra.mxu0 0.0
    %668 = vmatpush.msra.mxu0 0.0
    %669 = vmatpush.msra.mxu0 0.0
    %670 = vmatpush.msra.mxu0 %v650
    %671 = vmatpush.msra.mxu0 %v649
    %672 = vmatpush.msra.mxu0 %v648
    %673 = vmatpush.msra.mxu0 %v647
    %674 = vmatmul.f32.gmra.mxu0 %v656
    %v675 = vpop.f32.mrf.mxu0
    %v676 = vadd.f32 %v653, %v675
    %677 = vdwg.mxu0
    %679 = vrot.lane.b32.xlu0 %v676, 96
    %v680 = vpop.permute.xlu0 %679
    %v682 = vmul.f32 %v676, %v680
    %683 = vrot.lane.b32.xlu0 %v676, 64
    %v684 = vpop.permute.xlu0 %683
    %v686 = vmul.f32 %v644, %v684
    %v687 = vadd.f32 %v682, %v686
    %s688 = scalar_lea.vmem [#allocation9], 26
    %689 = vst.msk [vmem:[%s688] sm:$0x3] %vm113, %v687
    %v690 = vld [vmem:[%s160] sm:$0xff]
    %v691 = vld [vmem:[%s160 + $0x8] sm:$0xff]
    %v692 = vld [vmem:[%s160 + $0x10] sm:$0xff]
    %v693 = vld [vmem:[%s160 + $0x18] sm:$0xff]
    %v694 = vld [vmem:[%s165] sm:$0x1]
    %v696 = vperm.slane %v694, 0
    %v699 = vsel %vm78, %v687, 0
    %701 = vmatpush.msra.mxu0 0.0
    %702 = vmatpush.msra.mxu0 0.0
    %703 = vmatpush.msra.mxu0 0.0
    %704 = vmatpush.msra.mxu0 0.0
    %705 = vmatpush.msra.mxu0 0.0
    %706 = vmatpush.msra.mxu0 0.0
    %707 = vmatpush.msra.mxu0 0.0
    %708 = vmatpush.msra.mxu0 0.0
    %709 = vmatpush.msra.mxu0 0.0
    %710 = vmatpush.msra.mxu0 0.0
    %711 = vmatpush.msra.mxu0 0.0
    %712 = vmatpush.msra.mxu0 0.0
    %713 = vmatpush.msra.mxu0 %v693
    %714 = vmatpush.msra.mxu0 %v692
    %715 = vmatpush.msra.mxu0 %v691
    %716 = vmatpush.msra.mxu0 %v690
    %717 = vmatmul.f32.gmra.mxu0 %v699
    %v718 = vpop.f32.mrf.mxu0
    %v719 = vadd.f32 %v696, %v718
    %720 = vdwg.mxu0
    %722 = vrot.lane.b32.xlu0 %v719, 96
    %v723 = vpop.permute.xlu0 %722
    %v725 = vmul.f32 %v719, %v723
    %726 = vrot.lane.b32.xlu0 %v719, 64
    %v727 = vpop.permute.xlu0 %726
    %v729 = vmul.f32 %v687, %v727
    %v730 = vadd.f32 %v725, %v729
    %s731 = scalar_lea.vmem [#allocation9], 28
    %732 = vst.msk [vmem:[%s731] sm:$0x3] %vm113, %v730
    %s733 = scalar_lea.vmem [#allocation3], 10
    %v734 = vld [vmem:[%s733] sm:$0x3]
    %v735 = vld [vmem:[#allocation6] sm:$0xff]
    %v736 = vld [vmem:[#allocation6 + $0x8] sm:$0xff]
    %v737 = vld [vmem:[#allocation6 + $0x10] sm:$0xff]
    %v738 = vld [vmem:[#allocation6 + $0x18] sm:$0xff]
    %v739 = vld [vmem:[#allocation8] sm:$0x1]
    %v741 = vperm.slane %v739, 0
    %v744 = vsel %vm78, %v730, 0
    %746 = vmatpush.msra.mxu0 0.0
    %747 = vmatpush.msra.mxu0 0.0
    %748 = vmatpush.msra.mxu0 0.0
    %749 = vmatpush.msra.mxu0 0.0
    %750 = vmatpush.msra.mxu0 0.0
    %751 = vmatpush.msra.mxu0 0.0
    %752 = vmatpush.msra.mxu0 0.0
    %753 = vmatpush.msra.mxu0 0.0
    %754 = vmatpush.msra.mxu0 0.0
    %755 = vmatpush.msra.mxu0 0.0
    %756 = vmatpush.msra.mxu0 0.0
    %757 = vmatpush.msra.mxu0 0.0
    %758 = vmatpush.msra.mxu0 %v738
    %759 = vmatpush.msra.mxu0 %v737
    %760 = vmatpush.msra.mxu0 %v736
    %761 = vmatpush.msra.mxu0 %v735
    %762 = vmatmul.f32.gmra.mxu0 %v744
    %v763 = vpop.f32.mrf.mxu0
    %v764 = vadd.f32 %v741, %v763
    %765 = vdwg.mxu0
    %v766 = vadd.f32 %v764, %v734
    %768 = vrot.lane.b32.xlu0 %v766, 96
    %v769 = vpop.permute.xlu0 %768
    %v771 = vmul.f32 %v766, %v769
    %772 = vrot.lane.b32.xlu0 %v766, 64
    %v773 = vpop.permute.xlu0 %772
    %v775 = vmul.f32 %v730, %v773
    %v776 = vadd.f32 %v771, %v775
    %s777 = scalar_lea.vmem [#allocation9], 30
    %778 = vst.msk [vmem:[%s777] sm:$0x3] %vm113, %v776
    %v779 = vld [vmem:[%s115] sm:$0xff]
    %v780 = vld [vmem:[%s115 + $0x8] sm:$0xff]
    %v781 = vld [vmem:[%s115 + $0x10] sm:$0xff]
    %v782 = vld [vmem:[%s115 + $0x18] sm:$0xff]
    %v783 = vld [vmem:[%s120] sm:$0x1]
    %v785 = vperm.slane %v783, 0
    %v788 = vsel %vm78, %v776, 0
    %790 = vmatpush.msra.mxu0 0.0
    %791 = vmatpush.msra.mxu0 0.0
    %792 = vmatpush.msra.mxu0 0.0
    %793 = vmatpush.msra.mxu0 0.0
    %794 = vmatpush.msra.mxu0 0.0
    %795 = vmatpush.msra.mxu0 0.0
    %796 = vmatpush.msra.mxu0 0.0
    %797 = vmatpush.msra.mxu0 0.0
    %798 = vmatpush.msra.mxu0 0.0
    %799 = vmatpush.msra.mxu0 0.0
    %800 = vmatpush.msra.mxu0 0.0
    %801 = vmatpush.msra.mxu0 0.0
    %802 = vmatpush.msra.mxu0 %v782
    %803 = vmatpush.msra.mxu0 %v781
    %804 = vmatpush.msra.mxu0 %v780
    %805 = vmatpush.msra.mxu0 %v779
    %806 = vmatmul.f32.gmra.mxu0 %v788
    %v807 = vpop.f32.mrf.mxu0
    %v808 = vadd.f32 %v785, %v807
    %809 = vdwg.mxu0
    %811 = vrot.lane.b32.xlu0 %v808, 96
    %v812 = vpop.permute.xlu0 %811
    %v814 = vmul.f32 %v808, %v812
    %815 = vrot.lane.b32.xlu0 %v808, 64
    %v816 = vpop.permute.xlu0 %815
    %v818 = vmul.f32 %v776, %v816
    %v819 = vadd.f32 %v814, %v818
    %s820 = scalar_lea.vmem [#allocation9], 32
    %821 = vst.msk [vmem:[%s820] sm:$0x3] %vm113, %v819
    %v822 = vld [vmem:[%s160] sm:$0xff]
    %v823 = vld [vmem:[%s160 + $0x8] sm:$0xff]
    %v824 = vld [vmem:[%s160 + $0x10] sm:$0xff]
    %v825 = vld [vmem:[%s160 + $0x18] sm:$0xff]
    %v826 = vld [vmem:[%s165] sm:$0x1]
    %v828 = vperm.slane %v826, 0
    %v831 = vsel %vm78, %v819, 0
    %833 = vmatpush.msra.mxu0 0.0
    %834 = vmatpush.msra.mxu0 0.0
    %835 = vmatpush.msra.mxu0 0.0
    %836 = vmatpush.msra.mxu0 0.0
    %837 = vmatpush.msra.mxu0 0.0
    %838 = vmatpush.msra.mxu0 0.0
    %839 = vmatpush.msra.mxu0 0.0
    %840 = vmatpush.msra.mxu0 0.0
    %841 = vmatpush.msra.mxu0 0.0
    %842 = vmatpush.msra.mxu0 0.0
    %843 = vmatpush.msra.mxu0 0.0
    %844 = vmatpush.msra.mxu0 0.0
    %845 = vmatpush.msra.mxu0 %v825
    %846 = vmatpush.msra.mxu0 %v824
    %847 = vmatpush.msra.mxu0 %v823
    %848 = vmatpush.msra.mxu0 %v822
    %849 = vmatmul.f32.gmra.mxu0 %v831
    %v850 = vpop.f32.mrf.mxu0
    %v851 = vadd.f32 %v828, %v850
    %852 = vdwg.mxu0
    %854 = vrot.lane.b32.xlu0 %v851, 96
    %v855 = vpop.permute.xlu0 %854
    %v857 = vmul.f32 %v851, %v855
    %858 = vrot.lane.b32.xlu0 %v851, 64
    %v859 = vpop.permute.xlu0 %858
    %v861 = vmul.f32 %v819, %v859
    %v862 = vadd.f32 %v857, %v861
    %s863 = scalar_lea.vmem [#allocation9], 34
    %864 = vst.msk [vmem:[%s863] sm:$0x3] %vm113, %v862
    %s865 = scalar_lea.vmem [#allocation3], 12
    %v866 = vld [vmem:[%s865] sm:$0x3]
    %v867 = vld [vmem:[#allocation6] sm:$0xff]
    %v868 = vld [vmem:[#allocation6 + $0x8] sm:$0xff]
    %v869 = vld [vmem:[#allocation6 + $0x10] sm:$0xff]
    %v870 = vld [vmem:[#allocation6 + $0x18] sm:$0xff]
    %v871 = vld [vmem:[#allocation8] sm:$0x1]
    %v873 = vperm.slane %v871, 0
    %v876 = vsel %vm78, %v862, 0
    %878 = vmatpush.msra.mxu0 0.0
    %879 = vmatpush.msra.mxu0 0.0
    %880 = vmatpush.msra.mxu0 0.0
    %881 = vmatpush.msra.mxu0 0.0
    %882 = vmatpush.msra.mxu0 0.0
    %883 = vmatpush.msra.mxu0 0.0
    %884 = vmatpush.msra.mxu0 0.0
    %885 = vmatpush.msra.mxu0 0.0
    %886 = vmatpush.msra.mxu0 0.0
    %887 = vmatpush.msra.mxu0 0.0
    %888 = vmatpush.msra.mxu0 0.0
    %889 = vmatpush.msra.mxu0 0.0
    %890 = vmatpush.msra.mxu0 %v870
    %891 = vmatpush.msra.mxu0 %v869
    %892 = vmatpush.msra.mxu0 %v868
    %893 = vmatpush.msra.mxu0 %v867
    %894 = vmatmul.f32.gmra.mxu0 %v876
    %v895 = vpop.f32.mrf.mxu0
    %v896 = vadd.f32 %v873, %v895
    %897 = vdwg.mxu0
    %v898 = vadd.f32 %v896, %v866
    %900 = vrot.lane.b32.xlu0 %v898, 96
    %v901 = vpop.permute.xlu0 %900
    %v903 = vmul.f32 %v898, %v901
    %904 = vrot.lane.b32.xlu0 %v898, 64
    %v905 = vpop.permute.xlu0 %904
    %v907 = vmul.f32 %v862, %v905
    %v908 = vadd.f32 %v903, %v907
    %s909 = scalar_lea.vmem [#allocation9], 36
    %910 = vst.msk [vmem:[%s909] sm:$0x3] %vm113, %v908
    %v911 = vld [vmem:[%s115] sm:$0xff]
    %v912 = vld [vmem:[%s115 + $0x8] sm:$0xff]
    %v913 = vld [vmem:[%s115 + $0x10] sm:$0xff]
    %v914 = vld [vmem:[%s115 + $0x18] sm:$0xff]
    %v915 = vld [vmem:[%s120] sm:$0x1]
    %v917 = vperm.slane %v915, 0
    %v920 = vsel %vm78, %v908, 0
    %922 = vmatpush.msra.mxu0 0.0
    %923 = vmatpush.msra.mxu0 0.0
    %924 = vmatpush.msra.mxu0 0.0
    %925 = vmatpush.msra.mxu0 0.0
    %926 = vmatpush.msra.mxu0 0.0
    %927 = vmatpush.msra.mxu0 0.0
    %928 = vmatpush.msra.mxu0 0.0
    %929 = vmatpush.msra.mxu0 0.0
    %930 = vmatpush.msra.mxu0 0.0
    %931 = vmatpush.msra.mxu0 0.0
    %932 = vmatpush.msra.mxu0 0.0
    %933 = vmatpush.msra.mxu0 0.0
    %934 = vmatpush.msra.mxu0 %v914
    %935 = vmatpush.msra.mxu0 %v913
    %936 = vmatpush.msra.mxu0 %v912
    %937 = vmatpush.msra.mxu0 %v911
    %938 = vmatmul.f32.gmra.mxu0 %v920
    %v939 = vpop.f32.mrf.mxu0
    %v940 = vadd.f32 %v917, %v939
    %941 = vdwg.mxu0
    %943 = vrot.lane.b32.xlu0 %v940, 96
    %v944 = vpop.permute.xlu0 %943
    %v946 = vmul.f32 %v940, %v944
    %947 = vrot.lane.b32.xlu0 %v940, 64
    %v948 = vpop.permute.xlu0 %947
    %v950 = vmul.f32 %v908, %v948
    %v951 = vadd.f32 %v946, %v950
    %s952 = scalar_lea.vmem [#allocation9], 38
    %953 = vst.msk [vmem:[%s952] sm:$0x3] %vm113, %v951
    %v954 = vld [vmem:[%s160] sm:$0xff]
    %v955 = vld [vmem:[%s160 + $0x8] sm:$0xff]
    %v956 = vld [vmem:[%s160 + $0x10] sm:$0xff]
    %v957 = vld [vmem:[%s160 + $0x18] sm:$0xff]
    %v958 = vld [vmem:[%s165] sm:$0x1]
    %v960 = vperm.slane %v958, 0
    %v963 = vsel %vm78, %v951, 0
    %965 = vmatpush.msra.mxu0 0.0
    %966 = vmatpush.msra.mxu0 0.0
    %967 = vmatpush.msra.mxu0 0.0
    %968 = vmatpush.msra.mxu0 0.0
    %969 = vmatpush.msra.mxu0 0.0
    %970 = vmatpush.msra.mxu0 0.0
    %971 = vmatpush.msra.mxu0 0.0
    %972 = vmatpush.msra.mxu0 0.0
    %973 = vmatpush.msra.mxu0 0.0
    %974 = vmatpush.msra.mxu0 0.0
    %975 = vmatpush.msra.mxu0 0.0
    %976 = vmatpush.msra.mxu0 0.0
    %977 = vmatpush.msra.mxu0 %v957
    %978 = vmatpush.msra.mxu0 %v956
    %979 = vmatpush.msra.mxu0 %v955
    %980 = vmatpush.msra.mxu0 %v954
    %981 = vmatmul.f32.gmra.mxu0 %v963
    %v982 = vpop.f32.mrf.mxu0
    %v983 = vadd.f32 %v960, %v982
    %984 = vdwg.mxu0
    %986 = vrot.lane.b32.xlu0 %v983, 96
    %v987 = vpop.permute.xlu0 %986
    %v989 = vmul.f32 %v983, %v987
    %990 = vrot.lane.b32.xlu0 %v983, 64
    %v991 = vpop.permute.xlu0 %990
    %v993 = vmul.f32 %v951, %v991
    %v994 = vadd.f32 %v989, %v993
    %s995 = scalar_lea.vmem [#allocation9], 40
    %996 = vst.msk [vmem:[%s995] sm:$0x3] %vm113, %v994
    %s997 = scalar_lea.vmem [#allocation3], 14
    %v998 = vld [vmem:[%s997] sm:$0x3]
    %v999 = vld [vmem:[#allocation6] sm:$0xff]
    %v1000 = vld [vmem:[#allocation6 + $0x8] sm:$0xff]
    %v1001 = vld [vmem:[#allocation6 + $0x10] sm:$0xff]
    %v1002 = vld [vmem:[#allocation6 + $0x18] sm:$0xff]
    %v1003 = vld [vmem:[#allocation8] sm:$0x1]
    %v1005 = vperm.slane %v1003, 0
    %v1008 = vsel %vm78, %v994, 0
    %1010 = vmatpush.msra.mxu0 0.0
    %1011 = vmatpush.msra.mxu0 0.0
    %1012 = vmatpush.msra.mxu0 0.0
    %1013 = vmatpush.msra.mxu0 0.0
    %1014 = vmatpush.msra.mxu0 0.0
    %1015 = vmatpush.msra.mxu0 0.0
    %1016 = vmatpush.msra.mxu0 0.0
    %1017 = vmatpush.msra.mxu0 0.0
    %1018 = vmatpush.msra.mxu0 0.0
    %1019 = vmatpush.msra.mxu0 0.0
    %1020 = vmatpush.msra.mxu0 0.0
    %1021 = vmatpush.msra.mxu0 0.0
    %1022 = vmatpush.msra.mxu0 %v1002
    %1023 = vmatpush.msra.mxu0 %v1001
    %1024 = vmatpush.msra.mxu0 %v1000
    %1025 = vmatpush.msra.mxu0 %v999
    %1026 = vmatmul.f32.gmra.mxu0 %v1008
    %v1027 = vpop.f32.mrf.mxu0
    %v1028 = vadd.f32 %v1005, %v1027
    %1029 = vdwg.mxu0
    %v1030 = vadd.f32 %v1028, %v998
    %1032 = vrot.lane.b32.xlu0 %v1030, 96
    %v1033 = vpop.permute.xlu0 %1032
    %v1035 = vmul.f32 %v1030, %v1033
    %1036 = vrot.lane.b32.xlu0 %v1030, 64
    %v1037 = vpop.permute.xlu0 %1036
    %v1039 = vmul.f32 %v994, %v1037
    %v1040 = vadd.f32 %v1035, %v1039
    %s1041 = scalar_lea.vmem [#allocation9], 42
    %1042 = vst.msk [vmem:[%s1041] sm:$0x3] %vm113, %v1040
    %v1043 = vld [vmem:[%s115] sm:$0xff]
    %v1044 = vld [vmem:[%s115 + $0x8] sm:$0xff]
    %v1045 = vld [vmem:[%s115 + $0x10] sm:$0xff]
    %v1046 = vld [vmem:[%s115 + $0x18] sm:$0xff]
    %v1047 = vld [vmem:[%s120] sm:$0x1]
    %v1049 = vperm.slane %v1047, 0
    %v1052 = vsel %vm78, %v1040, 0
    %1054 = vmatpush.msra.mxu0 0.0
    %1055 = vmatpush.msra.mxu0 0.0
    %1056 = vmatpush.msra.mxu0 0.0
    %1057 = vmatpush.msra.mxu0 0.0
    %1058 = vmatpush.msra.mxu0 0.0
    %1059 = vmatpush.msra.mxu0 0.0
    %1060 = vmatpush.msra.mxu0 0.0
    %1061 = vmatpush.msra.mxu0 0.0
    %1062 = vmatpush.msra.mxu0 0.0
    %1063 = vmatpush.msra.mxu0 0.0
    %1064 = vmatpush.msra.mxu0 0.0
    %1065 = vmatpush.msra.mxu0 0.0
    %1066 = vmatpush.msra.mxu0 %v1046
    %1067 = vmatpush.msra.mxu0 %v1045
    %1068 = vmatpush.msra.mxu0 %v1044
    %1069 = vmatpush.msra.mxu0 %v1043
    %1070 = vmatmul.f32.gmra.mxu0 %v1052
    %v1071 = vpop.f32.mrf.mxu0
    %v1072 = vadd.f32 %v1049, %v1071
    %1073 = vdwg.mxu0
    %1075 = vrot.lane.b32.xlu0 %v1072, 96
    %v1076 = vpop.permute.xlu0 %1075
    %v1078 = vmul.f32 %v1072, %v1076
    %1079 = vrot.lane.b32.xlu0 %v1072, 64
    %v1080 = vpop.permute.xlu0 %1079
    %v1082 = vmul.f32 %v1040, %v1080
    %v1083 = vadd.f32 %v1078, %v1082
    %s1084 = scalar_lea.vmem [#allocation9], 44
    %1085 = vst.msk [vmem:[%s1084] sm:$0x3] %vm113, %v1083
    %v1086 = vld [vmem:[%s160] sm:$0xff]
    %v1087 = vld [vmem:[%s160 + $0x8] sm:$0xff]
    %v1088 = vld [vmem:[%s160 + $0x10] sm:$0xff]
    %v1089 = vld [vmem:[%s160 + $0x18] sm:$0xff]
    %v1090 = vld [vmem:[%s165] sm:$0x1]
    %v1092 = vperm.slane %v1090, 0
    %v1095 = vsel %vm78, %v1083, 0
    %1097 = vmatpush.msra.mxu0 0.0
    %1098 = vmatpush.msra.mxu0 0.0
    %1099 = vmatpush.msra.mxu0 0.0
    %1100 = vmatpush.msra.mxu0 0.0
    %1101 = vmatpush.msra.mxu0 0.0
    %1102 = vmatpush.msra.mxu0 0.0
    %1103 = vmatpush.msra.mxu0 0.0
    %1104 = vmatpush.msra.mxu0 0.0
    %1105 = vmatpush.msra.mxu0 0.0
    %1106 = vmatpush.msra.mxu0 0.0
    %1107 = vmatpush.msra.mxu0 0.0
    %1108 = vmatpush.msra.mxu0 0.0
    %1109 = vmatpush.msra.mxu0 %v1089
    %1110 = vmatpush.msra.mxu0 %v1088
    %1111 = vmatpush.msra.mxu0 %v1087
    %1112 = vmatpush.msra.mxu0 %v1086
    %1113 = vmatmul.f32.gmra.mxu0 %v1095
    %v1114 = vpop.f32.mrf.mxu0
    %v1115 = vadd.f32 %v1092, %v1114
    %1116 = vdwg.mxu0
    %1118 = vrot.lane.b32.xlu0 %v1115, 96
    %v1119 = vpop.permute.xlu0 %1118
    %v1121 = vmul.f32 %v1115, %v1119
    %1122 = vrot.lane.b32.xlu0 %v1115, 64
    %v1123 = vpop.permute.xlu0 %1122
    %v1125 = vmul.f32 %v1083, %v1123
    %v1126 = vadd.f32 %v1121, %v1125
    %s1127 = scalar_lea.vmem [#allocation9], 46
    %1128 = vst.msk [vmem:[%s1127] sm:$0x3] %vm113, %v1126
    %1129 = vst.msk [vmem:[#allocation2] sm:$0x3] %vm113, %v1126
    // Predicated region
    $region30: #{tpu_custom_call.1} parent=1 // pred_check
      _
    $region31: #{tpu_custom_call.1} parent=1 // pred_check_branch
      %1131 = sbr.rel (0) target = $region33
    $region32: #{tpu_custom_call.1} parent=1 // pred_region
      %1133 = vsyncadd [#allocation5], 0
      %s1134 = sshll.u32 [#allocation9], 4
      %s1135 = int_to_ptr.vmem [resolvable:$true] %s1134
      %s1136 = sshll.u32 %s3, 4
      %s1137 = int_to_ptr.hbm [resolvable:$true] %s1136
      %1142 = dma.vmem_to_hbm [thread:$0]  %s1135, 768, %s1137, [#allocation5], 32, 32, 2
    $region33: #{tpu_custom_call.1} parent=1 // pred_fallthru
      _
    // Predicated region
    $region34: #{tpu_custom_call.1} parent=1 // pred_check
      _
    $region35: #{tpu_custom_call.1} parent=1 // pred_check_branch
      %1144 = sbr.rel (0) target = $region37
    $region36: #{tpu_custom_call.1} parent=1 // pred_region
      %1146 = dma.done [#allocation5], 768
    $region37: #{tpu_custom_call.1} parent=1 // pred_fallthru
      _
    %1147 = vsyncpa [#allocation4], 1
    %1148 = vsyncpa [#allocation7], 1
    %1149 = vsyncpa [#allocation5], 1

</llo_original>
